<compile_context>
chip_gen: v6e
topology: v6e:2x2x1
jax: 0.10.0
libtpu: 0.0.40
codegen_flags: <defaults>
</compile_context>

<pallas_src>
import jax
import jax.numpy as jnp
from jax.experimental import pallas as pl
from jax.experimental.pallas import tpu as pltpu


def _round_up(n, m):
    return ((n + m - 1) // m) * m


def vaesvdd_kernel(
    # inputs (batch-tiled)
    x_ref, eps_ref,
    # encoder params (full blocks, VMEM-resident across grid steps)
    ew1_ref, eb1_ref, ew2_ref, eb2_ref, ew3_ref, eb3_ref,
    ew4m_ref, eb4m_ref, ew4v_ref, eb4v_ref,
    # decoder params
    dw1_ref, db1_ref, dw2_ref, db2_ref, dw3_ref, db3_ref, dw4_ref, db4_ref,
    # outputs (batch-tiled)
    recon_ref, mlz_ref,
):
    def linear(h, w_ref, b_ref):
        # Cast activations to the stored weight dtype (supports bf16 weights
        # on v6e/v7x) but always accumulate in f32 on the MXU.
        return (
            jnp.dot(h.astype(w_ref.dtype), w_ref[...],
                    preferred_element_type=jnp.float32)
            + b_ref[...].astype(jnp.float32)
        )

    def lrelu(v):
        return jnp.maximum(v, 0.01 * v)

    x = x_ref[...]

    # ---------------- encoder ----------------
    h = lrelu(linear(x, ew1_ref, eb1_ref))
    h = lrelu(linear(h, ew2_ref, eb2_ref))
    h = lrelu(linear(h, ew3_ref, eb3_ref))
    mu = linear(h, ew4m_ref, eb4m_ref)        # lane-contiguous, no slicing
    logvar = linear(h, ew4v_ref, eb4v_ref)

    # ------------- reparameterize -------------
    z = mu + eps_ref[...] * jnp.exp(0.5 * logvar)

    # ---------------- decoder ----------------
    g = lrelu(linear(z, dw1_ref, db1_ref))
    g = lrelu(linear(g, dw2_ref, db2_ref))
    g = lrelu(linear(g, dw3_ref, db3_ref))
    y = linear(g, dw4_ref, db4_ref)
    recon = 0.5 * jnp.tanh(0.5 * y) + 0.5     # sigmoid via EUP tanh (accurate)

    recon_ref[...] = recon.astype(recon_ref.dtype)
    # Single lane-dense slab for the three small outputs.
    mlz_ref[...] = jnp.concatenate([mu, logvar, z], axis=-1).astype(mlz_ref.dtype)


def vaesvdd_forward(x, eps, params, latent_size, *, block_batch=128):
    """Run the fused VAESVDD forward pass.

    params: dict with W: [in, out] and b: [1, out]; ew4/eb4 are pre-split into
    (ew4_mu, eb4_mu, ew4_lv, eb4_lv).
    Returns (recon, mu, logvar, z).
    """
    B, input_size = x.shape
    L = latent_size

    # Batch tile: multiple of 8 sublanes; pad batch up to a multiple of it.
    tb = _round_up(min(block_batch, _round_up(B, 8)), 8)
    Bp = _round_up(B, tb)
    if Bp != B:
        x = jnp.pad(x, ((0, Bp - B), (0, 0)))
        eps = jnp.pad(eps, ((0, Bp - B), (0, 0)))
    nb = Bp // tb

    inputs = (
        x, eps,
        params["ew1"], params["eb1"], params["ew2"], params["eb2"],
        params["ew3"], params["eb3"],
        params["ew4_mu"], params["eb4_mu"], params["ew4_lv"], params["eb4_lv"],
        params["dw1"], params["db1"], params["dw2"], params["db2"],
        params["dw3"], params["db3"], params["dw4"], params["db4"],
    )

    def tile_spec(feat):
        # Batch-tiled activation/output block; lane dim is the full feature dim.
        return pl.BlockSpec((tb, feat), lambda i: (i, 0))

    def const_spec(a):
        # Full-array block with a constant index: stays resident in VMEM.
        return pl.BlockSpec(a.shape, lambda i: (0,) * a.ndim)

    in_specs = [tile_spec(input_size), tile_spec(L)] + [const_spec(a) for a in inputs[2:]]

    out_shapes = (
        jax.ShapeDtypeStruct((Bp, input_size), jnp.float32),   # recon
        jax.ShapeDtypeStruct((Bp, 3 * L), jnp.float32),        # [mu | logvar | z]
    )
    out_specs = (tile_spec(input_size), tile_spec(3 * L))

    recon, mlz = pl.pallas_call(
        vaesvdd_kernel,
        out_shape=out_shapes,
        grid=(nb,),
        in_specs=in_specs,
        out_specs=out_specs,
        compiler_params=pltpu.CompilerParams(
            dimension_semantics=("parallel",),
        ),
    )(*inputs)

    recon = recon[:B]
    mlz = mlz[:B]
    mu = mlz[:, :L]
    logvar = mlz[:, L:2 * L]
    z = mlz[:, 2 * L:]
    return recon, mu, logvar, z


def _init_linear(key, fan_in, fan_out, dtype):
    """Deterministic init mimicking PyTorch Linear default (uniform +-1/sqrt(fan_in))."""
    kw, kb = jax.random.split(key)
    bound = 1.0 / jnp.sqrt(fan_in)
    w = jax.random.uniform(kw, (fan_in, fan_out), jnp.float32, -bound, bound)
    b = jax.random.uniform(kb, (1, fan_out), jnp.float32, -bound, bound)
    return w.astype(dtype), b.astype(dtype)


def make_params(key, input_size, h1, h2, h3, latent_size, dtype=jnp.float32):
    """dtype=jnp.bfloat16 halves weight DMA on v6e/v7x batched runs (f32 accum kept)."""
    keys = jax.random.split(key, 8)
    ew1, eb1 = _init_linear(keys[0], input_size, h1, dtype)
    ew2, eb2 = _init_linear(keys[1], h1, h2, dtype)
    ew3, eb3 = _init_linear(keys[2], h2, h3, dtype)
    ew4, eb4 = _init_linear(keys[3], h3, 2 * latent_size, dtype)
    dw1, db1 = _init_linear(keys[4], latent_size, h3, dtype)
    dw2, db2 = _init_linear(keys[5], h3, h2, dtype)
    dw3, db3 = _init_linear(keys[6], h2, h1, dtype)
    dw4, db4 = _init_linear(keys[7], h1, input_size, dtype)
    L = latent_size
    return dict(
        ew1=ew1, eb1=eb1, ew2=ew2, eb2=eb2, ew3=ew3, eb3=eb3,
        # Split the last encoder layer so mu/logvar are separate matmuls
        # (semantically identical to one Linear(h3, 2*latent)).
        ew4_mu=ew4[:, :L], eb4_mu=eb4[:, :L],
        ew4_lv=ew4[:, L:], eb4_lv=eb4[:, L:],
        dw1=dw1, db1=db1, dw2=dw2, db2=db2, dw3=dw3, db3=db3, dw4=dw4, db4=db4,
    )


def _reference_forward(x, eps, p, latent_size):
    """Pure-JAX reference for sanity checking."""
    f32 = lambda a: a.astype(jnp.float32)
    def lrelu(v):
        return jnp.where(v > 0, v, 0.01 * v)
    h = lrelu(x @ f32(p["ew1"]) + f32(p["eb1"]))
    h = lrelu(h @ f32(p["ew2"]) + f32(p["eb2"]))
    h = lrelu(h @ f32(p["ew3"]) + f32(p["eb3"]))
    mu = h @ f32(p["ew4_mu"]) + f32(p["eb4_mu"])
    logvar = h @ f32(p["ew4_lv"]) + f32(p["eb4_lv"])
    z = mu + eps * jnp.exp(0.5 * logvar)
    g = lrelu(z @ f32(p["dw1"]) + f32(p["db1"]))
    g = lrelu(g @ f32(p["dw2"]) + f32(p["db2"]))
    g = lrelu(g @ f32(p["dw3"]) + f32(p["db3"]))
    recon = jax.nn.sigmoid(g @ f32(p["dw4"]) + f32(p["db4"]))
    return recon, mu, logvar, z


if __name__ == "__main__":
    # Small shapes consistent with the module's MLP structure.
    batch = 16
    input_size, h1, h2, h3, latent_size = 32, 64, 48, 32, 16

    key = jax.random.PRNGKey(0)
    k_x, k_eps, k_p = jax.random.split(key, 3)

    x = jax.random.uniform(k_x, (batch, input_size), jnp.float32)       # VAE-style inputs in [0,1)
    eps = jax.random.normal(k_eps, (batch, latent_size), jnp.float32)   # randn_like(logvar)
    params = make_params(k_p, input_size, h1, h2, h3, latent_size)

    # block_batch=8 exercises the batch grid (2 steps) at this small batch.
    recon, mu, logvar, z = jax.block_until_ready(
        vaesvdd_forward(x, eps, params, latent_size, block_batch=8)
    )

    # Sanity check against pure-JAX reference.
    r_recon, r_mu, r_logvar, r_z = _reference_forward(x, eps, params, latent_size)
    assert jnp.allclose(recon, r_recon, atol=2e-5), "recon mismatch"
    assert jnp.allclose(mu, r_mu, atol=2e-5), "mu mismatch"
    assert jnp.allclose(logvar, r_logvar, atol=2e-5), "logvar mismatch"
    assert jnp.allclose(z, r_z, atol=2e-5), "z mismatch"

    print("KERNEL_OK")
</pallas_src>

<mosaic_0001>
module attributes {stable_mosaic.version = 11 : i64} {
  func.func @vaesvdd_kernel(%arg0: i32, %arg1: memref<8x32xf32, #tpu.memory_space<vmem>>, %arg2: memref<8x16xf32, #tpu.memory_space<vmem>>, %arg3: memref<32x64xf32, #tpu.memory_space<vmem>>, %arg4: memref<1x64xf32, #tpu.memory_space<vmem>>, %arg5: memref<64x48xf32, #tpu.memory_space<vmem>>, %arg6: memref<1x48xf32, #tpu.memory_space<vmem>>, %arg7: memref<48x32xf32, #tpu.memory_space<vmem>>, %arg8: memref<1x32xf32, #tpu.memory_space<vmem>>, %arg9: memref<32x16xf32, #tpu.memory_space<vmem>>, %arg10: memref<1x16xf32, #tpu.memory_space<vmem>>, %arg11: memref<32x16xf32, #tpu.memory_space<vmem>>, %arg12: memref<1x16xf32, #tpu.memory_space<vmem>>, %arg13: memref<16x32xf32, #tpu.memory_space<vmem>>, %arg14: memref<1x32xf32, #tpu.memory_space<vmem>>, %arg15: memref<32x48xf32, #tpu.memory_space<vmem>>, %arg16: memref<1x48xf32, #tpu.memory_space<vmem>>, %arg17: memref<48x64xf32, #tpu.memory_space<vmem>>, %arg18: memref<1x64xf32, #tpu.memory_space<vmem>>, %arg19: memref<64x32xf32, #tpu.memory_space<vmem>>, %arg20: memref<1x32xf32, #tpu.memory_space<vmem>>, %arg21: memref<8x32xf32, #tpu.memory_space<vmem>>, %arg22: memref<8x48xf32, #tpu.memory_space<vmem>>) attributes {dimension_semantics = [#tpu.dimension_semantics<parallel>], iteration_bounds = array<i64: 2>, scalar_prefetch = 0 : i64, scratch_operands = 0 : i64, tpu.core_type = #tpu.core_type<tc>, window_params = [{transform_indices = @transform_0, window_bounds = array<i64: 8, 32>}, {transform_indices = @transform_1, window_bounds = array<i64: 8, 16>}, {pipeline_mode = #tpu.pipeline_mode<synchronous>, transform_indices = @transform_2, window_bounds = array<i64: 32, 64>}, {pipeline_mode = #tpu.pipeline_mode<synchronous>, transform_indices = @transform_3, window_bounds = array<i64: 1, 64>}, {pipeline_mode = #tpu.pipeline_mode<synchronous>, transform_indices = @transform_4, window_bounds = array<i64: 64, 48>}, {pipeline_mode = #tpu.pipeline_mode<synchronous>, transform_indices = @transform_5, window_bounds = array<i64: 1, 48>}, {pipeline_mode = #tpu.pipeline_mode<synchronous>, transform_indices = @transform_6, window_bounds = array<i64: 48, 32>}, {pipeline_mode = #tpu.pipeline_mode<synchronous>, transform_indices = @transform_7, window_bounds = array<i64: 1, 32>}, {pipeline_mode = #tpu.pipeline_mode<synchronous>, transform_indices = @transform_8, window_bounds = array<i64: 32, 16>}, {pipeline_mode = #tpu.pipeline_mode<synchronous>, transform_indices = @transform_9, window_bounds = array<i64: 1, 16>}, {pipeline_mode = #tpu.pipeline_mode<synchronous>, transform_indices = @transform_10, window_bounds = array<i64: 32, 16>}, {pipeline_mode = #tpu.pipeline_mode<synchronous>, transform_indices = @transform_11, window_bounds = array<i64: 1, 16>}, {pipeline_mode = #tpu.pipeline_mode<synchronous>, transform_indices = @transform_12, window_bounds = array<i64: 16, 32>}, {pipeline_mode = #tpu.pipeline_mode<synchronous>, transform_indices = @transform_13, window_bounds = array<i64: 1, 32>}, {pipeline_mode = #tpu.pipeline_mode<synchronous>, transform_indices = @transform_14, window_bounds = array<i64: 32, 48>}, {pipeline_mode = #tpu.pipeline_mode<synchronous>, transform_indices = @transform_15, window_bounds = array<i64: 1, 48>}, {pipeline_mode = #tpu.pipeline_mode<synchronous>, transform_indices = @transform_16, window_bounds = array<i64: 48, 64>}, {pipeline_mode = #tpu.pipeline_mode<synchronous>, transform_indices = @transform_17, window_bounds = array<i64: 1, 64>}, {pipeline_mode = #tpu.pipeline_mode<synchronous>, transform_indices = @transform_18, window_bounds = array<i64: 64, 32>}, {pipeline_mode = #tpu.pipeline_mode<synchronous>, transform_indices = @transform_19, window_bounds = array<i64: 1, 32>}, {transform_indices = @transform_20, window_bounds = array<i64: 8, 32>}, {transform_indices = @transform_21, window_bounds = array<i64: 8, 48>}]} {
    %c0 = arith.constant 0 : index
    %c0_0 = arith.constant 0 : index
    %0 = vector.load %arg1[%c0, %c0_0] : memref<8x32xf32, #tpu.memory_space<vmem>>, vector<8x32xf32>
    %c0_1 = arith.constant 0 : index
    %c0_2 = arith.constant 0 : index
    %1 = vector.load %arg3[%c0_1, %c0_2] : memref<32x64xf32, #tpu.memory_space<vmem>>, vector<32x64xf32>
    %cst = arith.constant dense<0.000000e+00> : vector<8x64xf32>
    %2 = tpu.matmul %0, %1, %cst {dimension_numbers = #tpu.dot_dimension_numbers<[1], [0], [0], [1], [0, 0, 1, 1], [], []>} : vector<8x32xf32>, vector<32x64xf32>, vector<8x64xf32> -> vector<8x64xf32>
    %c0_3 = arith.constant 0 : index
    %c0_4 = arith.constant 0 : index
    %3 = vector.load %arg4[%c0_3, %c0_4] : memref<1x64xf32, #tpu.memory_space<vmem>>, vector<1x64xf32>
    %4 = vector.broadcast %3 : vector<1x64xf32> to vector<8x64xf32>
    %5 = arith.addf %2, %4 : vector<8x64xf32>
    %cst_5 = arith.constant 0.00999999977 : f32
    %6 = vector.broadcast %cst_5 : f32 to vector<8x64xf32>
    %7 = arith.mulf %6, %5 : vector<8x64xf32>
    %8 = arith.maximumf %5, %7 : vector<8x64xf32>
    %c0_6 = arith.constant 0 : index
    %c0_7 = arith.constant 0 : index
    %9 = vector.load %arg5[%c0_6, %c0_7] : memref<64x48xf32, #tpu.memory_space<vmem>>, vector<64x48xf32>
    %cst_8 = arith.constant dense<0.000000e+00> : vector<8x48xf32>
    %10 = tpu.matmul %8, %9, %cst_8 {dimension_numbers = #tpu.dot_dimension_numbers<[1], [0], [0], [1], [0, 0, 1, 1], [], []>} : vector<8x64xf32>, vector<64x48xf32>, vector<8x48xf32> -> vector<8x48xf32>
    %c0_9 = arith.constant 0 : index
    %c0_10 = arith.constant 0 : index
    %11 = vector.load %arg6[%c0_9, %c0_10] : memref<1x48xf32, #tpu.memory_space<vmem>>, vector<1x48xf32>
    %12 = vector.broadcast %11 : vector<1x48xf32> to vector<8x48xf32>
    %13 = arith.addf %10, %12 : vector<8x48xf32>
    %cst_11 = arith.constant 0.00999999977 : f32
    %14 = vector.broadcast %cst_11 : f32 to vector<8x48xf32>
    %15 = arith.mulf %14, %13 : vector<8x48xf32>
    %16 = arith.maximumf %13, %15 : vector<8x48xf32>
    %c0_12 = arith.constant 0 : index
    %c0_13 = arith.constant 0 : index
    %17 = vector.load %arg7[%c0_12, %c0_13] : memref<48x32xf32, #tpu.memory_space<vmem>>, vector<48x32xf32>
    %cst_14 = arith.constant dense<0.000000e+00> : vector<8x32xf32>
    %18 = tpu.matmul %16, %17, %cst_14 {dimension_numbers = #tpu.dot_dimension_numbers<[1], [0], [0], [1], [0, 0, 1, 1], [], []>} : vector<8x48xf32>, vector<48x32xf32>, vector<8x32xf32> -> vector<8x32xf32>
    %c0_15 = arith.constant 0 : index
    %c0_16 = arith.constant 0 : index
    %19 = vector.load %arg8[%c0_15, %c0_16] : memref<1x32xf32, #tpu.memory_space<vmem>>, vector<1x32xf32>
    %20 = vector.broadcast %19 : vector<1x32xf32> to vector<8x32xf32>
    %21 = arith.addf %18, %20 : vector<8x32xf32>
    %cst_17 = arith.constant 0.00999999977 : f32
    %22 = vector.broadcast %cst_17 : f32 to vector<8x32xf32>
    %23 = arith.mulf %22, %21 : vector<8x32xf32>
    %24 = arith.maximumf %21, %23 : vector<8x32xf32>
    %c0_18 = arith.constant 0 : index
    %c0_19 = arith.constant 0 : index
    %25 = vector.load %arg9[%c0_18, %c0_19] : memref<32x16xf32, #tpu.memory_space<vmem>>, vector<32x16xf32>
    %cst_20 = arith.constant dense<0.000000e+00> : vector<8x16xf32>
    %26 = tpu.matmul %24, %25, %cst_20 {dimension_numbers = #tpu.dot_dimension_numbers<[1], [0], [0], [1], [0, 0, 1, 1], [], []>} : vector<8x32xf32>, vector<32x16xf32>, vector<8x16xf32> -> vector<8x16xf32>
    %c0_21 = arith.constant 0 : index
    %c0_22 = arith.constant 0 : index
    %27 = vector.load %arg10[%c0_21, %c0_22] : memref<1x16xf32, #tpu.memory_space<vmem>>, vector<1x16xf32>
    %28 = vector.broadcast %27 : vector<1x16xf32> to vector<8x16xf32>
    %29 = arith.addf %26, %28 : vector<8x16xf32>
    %c0_23 = arith.constant 0 : index
    %c0_24 = arith.constant 0 : index
    %30 = vector.load %arg11[%c0_23, %c0_24] : memref<32x16xf32, #tpu.memory_space<vmem>>, vector<32x16xf32>
    %cst_25 = arith.constant dense<0.000000e+00> : vector<8x16xf32>
    %31 = tpu.matmul %24, %30, %cst_25 {dimension_numbers = #tpu.dot_dimension_numbers<[1], [0], [0], [1], [0, 0, 1, 1], [], []>} : vector<8x32xf32>, vector<32x16xf32>, vector<8x16xf32> -> vector<8x16xf32>
    %c0_26 = arith.constant 0 : index
    %c0_27 = arith.constant 0 : index
    %32 = vector.load %arg12[%c0_26, %c0_27] : memref<1x16xf32, #tpu.memory_space<vmem>>, vector<1x16xf32>
    %33 = vector.broadcast %32 : vector<1x16xf32> to vector<8x16xf32>
    %34 = arith.addf %31, %33 : vector<8x16xf32>
    %c0_28 = arith.constant 0 : index
    %c0_29 = arith.constant 0 : index
    %35 = vector.load %arg2[%c0_28, %c0_29] : memref<8x16xf32, #tpu.memory_space<vmem>>, vector<8x16xf32>
    %cst_30 = arith.constant 5.000000e-01 : f32
    %36 = vector.broadcast %cst_30 : f32 to vector<8x16xf32>
    %37 = arith.mulf %36, %34 : vector<8x16xf32>
    %38 = math.exp %37 : vector<8x16xf32>
    %39 = arith.mulf %35, %38 : vector<8x16xf32>
    %40 = arith.addf %29, %39 : vector<8x16xf32>
    %c0_31 = arith.constant 0 : index
    %c0_32 = arith.constant 0 : index
    %41 = vector.load %arg13[%c0_31, %c0_32] : memref<16x32xf32, #tpu.memory_space<vmem>>, vector<16x32xf32>
    %cst_33 = arith.constant dense<0.000000e+00> : vector<8x32xf32>
    %42 = tpu.matmul %40, %41, %cst_33 {dimension_numbers = #tpu.dot_dimension_numbers<[1], [0], [0], [1], [0, 0, 1, 1], [], []>} : vector<8x16xf32>, vector<16x32xf32>, vector<8x32xf32> -> vector<8x32xf32>
    %c0_34 = arith.constant 0 : index
    %c0_35 = arith.constant 0 : index
    %43 = vector.load %arg14[%c0_34, %c0_35] : memref<1x32xf32, #tpu.memory_space<vmem>>, vector<1x32xf32>
    %44 = vector.broadcast %43 : vector<1x32xf32> to vector<8x32xf32>
    %45 = arith.addf %42, %44 : vector<8x32xf32>
    %cst_36 = arith.constant 0.00999999977 : f32
    %46 = vector.broadcast %cst_36 : f32 to vector<8x32xf32>
    %47 = arith.mulf %46, %45 : vector<8x32xf32>
    %48 = arith.maximumf %45, %47 : vector<8x32xf32>
    %c0_37 = arith.constant 0 : index
    %c0_38 = arith.constant 0 : index
    %49 = vector.load %arg15[%c0_37, %c0_38] : memref<32x48xf32, #tpu.memory_space<vmem>>, vector<32x48xf32>
    %cst_39 = arith.constant dense<0.000000e+00> : vector<8x48xf32>
    %50 = tpu.matmul %48, %49, %cst_39 {dimension_numbers = #tpu.dot_dimension_numbers<[1], [0], [0], [1], [0, 0, 1, 1], [], []>} : vector<8x32xf32>, vector<32x48xf32>, vector<8x48xf32> -> vector<8x48xf32>
    %c0_40 = arith.constant 0 : index
    %c0_41 = arith.constant 0 : index
    %51 = vector.load %arg16[%c0_40, %c0_41] : memref<1x48xf32, #tpu.memory_space<vmem>>, vector<1x48xf32>
    %52 = vector.broadcast %51 : vector<1x48xf32> to vector<8x48xf32>
    %53 = arith.addf %50, %52 : vector<8x48xf32>
    %cst_42 = arith.constant 0.00999999977 : f32
    %54 = vector.broadcast %cst_42 : f32 to vector<8x48xf32>
    %55 = arith.mulf %54, %53 : vector<8x48xf32>
    %56 = arith.maximumf %53, %55 : vector<8x48xf32>
    %c0_43 = arith.constant 0 : index
    %c0_44 = arith.constant 0 : index
    %57 = vector.load %arg17[%c0_43, %c0_44] : memref<48x64xf32, #tpu.memory_space<vmem>>, vector<48x64xf32>
    %cst_45 = arith.constant dense<0.000000e+00> : vector<8x64xf32>
    %58 = tpu.matmul %56, %57, %cst_45 {dimension_numbers = #tpu.dot_dimension_numbers<[1], [0], [0], [1], [0, 0, 1, 1], [], []>} : vector<8x48xf32>, vector<48x64xf32>, vector<8x64xf32> -> vector<8x64xf32>
    %c0_46 = arith.constant 0 : index
    %c0_47 = arith.constant 0 : index
    %59 = vector.load %arg18[%c0_46, %c0_47] : memref<1x64xf32, #tpu.memory_space<vmem>>, vector<1x64xf32>
    %60 = vector.broadcast %59 : vector<1x64xf32> to vector<8x64xf32>
    %61 = arith.addf %58, %60 : vector<8x64xf32>
    %cst_48 = arith.constant 0.00999999977 : f32
    %62 = vector.broadcast %cst_48 : f32 to vector<8x64xf32>
    %63 = arith.mulf %62, %61 : vector<8x64xf32>
    %64 = arith.maximumf %61, %63 : vector<8x64xf32>
    %c0_49 = arith.constant 0 : index
    %c0_50 = arith.constant 0 : index
    %65 = vector.load %arg19[%c0_49, %c0_50] : memref<64x32xf32, #tpu.memory_space<vmem>>, vector<64x32xf32>
    %cst_51 = arith.constant dense<0.000000e+00> : vector<8x32xf32>
    %66 = tpu.matmul %64, %65, %cst_51 {dimension_numbers = #tpu.dot_dimension_numbers<[1], [0], [0], [1], [0, 0, 1, 1], [], []>} : vector<8x64xf32>, vector<64x32xf32>, vector<8x32xf32> -> vector<8x32xf32>
    %c0_52 = arith.constant 0 : index
    %c0_53 = arith.constant 0 : index
    %67 = vector.load %arg20[%c0_52, %c0_53] : memref<1x32xf32, #tpu.memory_space<vmem>>, vector<1x32xf32>
    %68 = vector.broadcast %67 : vector<1x32xf32> to vector<8x32xf32>
    %69 = arith.addf %66, %68 : vector<8x32xf32>
    %cst_54 = arith.constant 5.000000e-01 : f32
    %70 = vector.broadcast %cst_54 : f32 to vector<8x32xf32>
    %71 = arith.mulf %70, %69 : vector<8x32xf32>
    %72 = math.tanh %71 : vector<8x32xf32>
    %cst_55 = arith.constant 5.000000e-01 : f32
    %73 = vector.broadcast %cst_55 : f32 to vector<8x32xf32>
    %74 = arith.mulf %73, %72 : vector<8x32xf32>
    %cst_56 = arith.constant 5.000000e-01 : f32
    %75 = vector.broadcast %cst_56 : f32 to vector<8x32xf32>
    %76 = arith.addf %74, %75 : vector<8x32xf32>
    %c0_57 = arith.constant 0 : index
    %c0_58 = arith.constant 0 : index
    %77 = vector.load %arg21[%c0_57, %c0_58] : memref<8x32xf32, #tpu.memory_space<vmem>>, vector<8x32xf32>
    tpu.vector_store %arg21[%c0_57, %c0_58], %76 {strides = array<i32>} : memref<8x32xf32, #tpu.memory_space<vmem>>, vector<8x32xf32>,
    %78 = tpu.concatenate %29, %34, %40 in 1 : vector<8x16xf32>, vector<8x16xf32>, vector<8x16xf32> -> vector<8x48xf32>
    %c0_59 = arith.constant 0 : index
    %c0_60 = arith.constant 0 : index
    %79 = vector.load %arg22[%c0_59, %c0_60] : memref<8x48xf32, #tpu.memory_space<vmem>>, vector<8x48xf32>
    tpu.vector_store %arg22[%c0_59, %c0_60], %78 {strides = array<i32>} : memref<8x48xf32, #tpu.memory_space<vmem>>, vector<8x48xf32>,
    return
  }
  func.func @transform_0(%arg0: i32) -> (i32, i32) {
    %c0_i32 = arith.constant 0 : i32
    %c0_i32_0 = arith.constant 0 : i32
    return %arg0, %c0_i32 : i32, i32
  }
  func.func @transform_1(%arg0: i32) -> (i32, i32) {
    %c0_i32 = arith.constant 0 : i32
    %c0_i32_0 = arith.constant 0 : i32
    return %arg0, %c0_i32 : i32, i32
  }
  func.func @transform_2(%arg0: i32) -> (i32, i32) {
    %c0_i32 = arith.constant 0 : i32
    %c0_i32_0 = arith.constant 0 : i32
    %c0_i32_1 = arith.constant 0 : i32
    return %c0_i32, %c0_i32_0 : i32, i32
  }
  func.func @transform_3(%arg0: i32) -> (i32, i32) {
    %c0_i32 = arith.constant 0 : i32
    %c0_i32_0 = arith.constant 0 : i32
    %c0_i32_1 = arith.constant 0 : i32
    return %c0_i32, %c0_i32_0 : i32, i32
  }
  func.func @transform_4(%arg0: i32) -> (i32, i32) {
    %c0_i32 = arith.constant 0 : i32
    %c0_i32_0 = arith.constant 0 : i32
    %c0_i32_1 = arith.constant 0 : i32
    return %c0_i32, %c0_i32_0 : i32, i32
  }
  func.func @transform_5(%arg0: i32) -> (i32, i32) {
    %c0_i32 = arith.constant 0 : i32
    %c0_i32_0 = arith.constant 0 : i32
    %c0_i32_1 = arith.constant 0 : i32
    return %c0_i32, %c0_i32_0 : i32, i32
  }
  func.func @transform_6(%arg0: i32) -> (i32, i32) {
    %c0_i32 = arith.constant 0 : i32
    %c0_i32_0 = arith.constant 0 : i32
    %c0_i32_1 = arith.constant 0 : i32
    return %c0_i32, %c0_i32_0 : i32, i32
  }
  func.func @transform_7(%arg0: i32) -> (i32, i32) {
    %c0_i32 = arith.constant 0 : i32
    %c0_i32_0 = arith.constant 0 : i32
    %c0_i32_1 = arith.constant 0 : i32
    return %c0_i32, %c0_i32_0 : i32, i32
  }
  func.func @transform_8(%arg0: i32) -> (i32, i32) {
    %c0_i32 = arith.constant 0 : i32
    %c0_i32_0 = arith.constant 0 : i32
    %c0_i32_1 = arith.constant 0 : i32
    return %c0_i32, %c0_i32_0 : i32, i32
  }
  func.func @transform_9(%arg0: i32) -> (i32, i32) {
    %c0_i32 = arith.constant 0 : i32
    %c0_i32_0 = arith.constant 0 : i32
    %c0_i32_1 = arith.constant 0 : i32
    return %c0_i32, %c0_i32_0 : i32, i32
  }
  func.func @transform_10(%arg0: i32) -> (i32, i32) {
    %c0_i32 = arith.constant 0 : i32
    %c0_i32_0 = arith.constant 0 : i32
    %c0_i32_1 = arith.constant 0 : i32
    return %c0_i32, %c0_i32_0 : i32, i32
  }
  func.func @transform_11(%arg0: i32) -> (i32, i32) {
    %c0_i32 = arith.constant 0 : i32
    %c0_i32_0 = arith.constant 0 : i32
    %c0_i32_1 = arith.constant 0 : i32
    return %c0_i32, %c0_i32_0 : i32, i32
  }
  func.func @transform_12(%arg0: i32) -> (i32, i32) {
    %c0_i32 = arith.constant 0 : i32
    %c0_i32_0 = arith.constant 0 : i32
    %c0_i32_1 = arith.constant 0 : i32
    return %c0_i32, %c0_i32_0 : i32, i32
  }
  func.func @transform_13(%arg0: i32) -> (i32, i32) {
    %c0_i32 = arith.constant 0 : i32
    %c0_i32_0 = arith.constant 0 : i32
    %c0_i32_1 = arith.constant 0 : i32
    return %c0_i32, %c0_i32_0 : i32, i32
  }
  func.func @transform_14(%arg0: i32) -> (i32, i32) {
    %c0_i32 = arith.constant 0 : i32
    %c0_i32_0 = arith.constant 0 : i32
    %c0_i32_1 = arith.constant 0 : i32
    return %c0_i32, %c0_i32_0 : i32, i32
  }
  func.func @transform_15(%arg0: i32) -> (i32, i32) {
    %c0_i32 = arith.constant 0 : i32
    %c0_i32_0 = arith.constant 0 : i32
    %c0_i32_1 = arith.constant 0 : i32
    return %c0_i32, %c0_i32_0 : i32, i32
  }
  func.func @transform_16(%arg0: i32) -> (i32, i32) {
    %c0_i32 = arith.constant 0 : i32
    %c0_i32_0 = arith.constant 0 : i32
    %c0_i32_1 = arith.constant 0 : i32
    return %c0_i32, %c0_i32_0 : i32, i32
  }
  func.func @transform_17(%arg0: i32) -> (i32, i32) {
    %c0_i32 = arith.constant 0 : i32
    %c0_i32_0 = arith.constant 0 : i32
    %c0_i32_1 = arith.constant 0 : i32
    return %c0_i32, %c0_i32_0 : i32, i32
  }
  func.func @transform_18(%arg0: i32) -> (i32, i32) {
    %c0_i32 = arith.constant 0 : i32
    %c0_i32_0 = arith.constant 0 : i32
    %c0_i32_1 = arith.constant 0 : i32
    return %c0_i32, %c0_i32_0 : i32, i32
  }
  func.func @transform_19(%arg0: i32) -> (i32, i32) {
    %c0_i32 = arith.constant 0 : i32
    %c0_i32_0 = arith.constant 0 : i32
    %c0_i32_1 = arith.constant 0 : i32
    return %c0_i32, %c0_i32_0 : i32, i32
  }
  func.func @transform_20(%arg0: i32) -> (i32, i32) {
    %c0_i32 = arith.constant 0 : i32
    %c0_i32_0 = arith.constant 0 : i32
    return %arg0, %c0_i32 : i32, i32
  }
  func.func @transform_21(%arg0: i32) -> (i32, i32) {
    %c0_i32 = arith.constant 0 : i32
    %c0_i32_0 = arith.constant 0 : i32
    return %arg0, %c0_i32 : i32, i32
  }
}

</mosaic_0001>

<llo_original>
// kernel: tpu_custom_call.1
$region0: #{tpu_custom_call.1}
  #allocation0 [shape = 'u32[]', space=smem, size = 0x4, offset = 0x4, fixed_abs, tag = 'smem constant byte address 0x4 - core index']
  #allocation1 [shape = 'u32[144,128]{1,0:T(1,128)}', space=vmem, size = 0x12000, scoped, tag = 'internal scratch']
  %s0 = inlined_call_operand.vmem [shape: f32[16,32], index: 0, kind: input, shape index: {}]
  %s1 = inlined_call_operand.vmem [shape: f32[16,16], index: 1, kind: input, shape index: {}]
  %s2 = inlined_call_operand.vmem [shape: f32[32,64], index: 2, kind: input, shape index: {}]
  %s3 = inlined_call_operand.vmem [shape: f32[1,64], index: 3, kind: input, shape index: {}]
  %s4 = inlined_call_operand.vmem [shape: f32[64,48], index: 4, kind: input, shape index: {}]
  %s5 = inlined_call_operand.vmem [shape: f32[1,48], index: 5, kind: input, shape index: {}]
  %s6 = inlined_call_operand.vmem [shape: f32[48,32], index: 6, kind: input, shape index: {}]
  %s7 = inlined_call_operand.vmem [shape: f32[1,32], index: 7, kind: input, shape index: {}]
  %s8 = inlined_call_operand.vmem [shape: f32[32,16], index: 8, kind: input, shape index: {}]
  %s9 = inlined_call_operand.vmem [shape: f32[1,16], index: 9, kind: input, shape index: {}]
  %s10 = inlined_call_operand.vmem [shape: f32[32,16], index: 10, kind: input, shape index: {}]
  %s11 = inlined_call_operand.vmem [shape: f32[1,16], index: 11, kind: input, shape index: {}]
  %s12 = inlined_call_operand.vmem [shape: f32[16,32], index: 12, kind: input, shape index: {}]
  %s13 = inlined_call_operand.vmem [shape: f32[1,32], index: 13, kind: input, shape index: {}]
  %s14 = inlined_call_operand.vmem [shape: f32[32,48], index: 14, kind: input, shape index: {}]
  %s15 = inlined_call_operand.vmem [shape: f32[1,48], index: 15, kind: input, shape index: {}]
  %s16 = inlined_call_operand.vmem [shape: f32[48,64], index: 16, kind: input, shape index: {}]
  %s17 = inlined_call_operand.vmem [shape: f32[1,64], index: 17, kind: input, shape index: {}]
  %s18 = inlined_call_operand.vmem [shape: f32[64,32], index: 18, kind: input, shape index: {}]
  %s19 = inlined_call_operand.vmem [shape: f32[1,32], index: 19, kind: input, shape index: {}]
  %s20 = inlined_call_operand.hbm [shape: f32[16,32], index: 20, kind: output, shape index: {0}]
  %s21 = inlined_call_operand.hbm [shape: f32[16,48], index: 21, kind: output, shape index: {1}]
  %22 = xla_tuple %s20, %s21
  %s23 = sld [smem:[#allocation0]]
  $region121: #{tpu_custom_call.1} parent=0
    _
  %s25 = ssub.s32 1, %s23
  %s26 = scalar_select 0, %s25, %s23
  $region1: #{tpu_custom_call.1} parent=0
    #allocation2 [shape = 'u8[8192]{0}', space=vmem, size = 0x2000, scoped, tag = 'output window, operand 0']
    #allocation3 [shape = 's32[2]{0}', space=sflag, size = 0x8, scoped, tag = 'scoped memory for tpu_custom_call.1']
    #allocation4 [shape = 'u8[8192]{0}', space=vmem, size = 0x2000, scoped, tag = 'output window, operand 1']
    #allocation5 [shape = 's32[2]{0}', space=sflag, size = 0x8, scoped, tag = 'scoped memory for tpu_custom_call.1']
    %27 = vsyncpa [#allocation3], 0
    %s28 = scalar_lea.sflag [#allocation3], 1
    %29 = vsyncpa %s28, 0
    %30 = vsyncpa [#allocation5], 0
    %s31 = scalar_lea.sflag [#allocation5], 1
    %32 = vsyncpa %s31, 0
    loop: start=0, step=1, limit=4
    $region2: #{tpu_custom_call.1} parent=1 // loop_pre_header
      _
    $region3: #{tpu_custom_call.1} parent=1 // loop_header
      %s34 = sphi 0, %s38
      %p35 = scmp.ge.s32.totalorder %s34, 4
      %s44 = sphi 0, %s46
      %s47 = sphi 0, %s44
      %s48 = sphi 0, %s47
      %s64 = sphi 0, %s48
      %s70 = sphi 0, %s72
      %s73 = sphi 0, %s70
      %s74 = sphi 0, %s73
      %s90 = sphi 0, %s74
      %s94 = sphi 0, %s94
      %s96 = sphi 0, %s94
      %s97 = sphi 0, %s96
      %s111 = sphi 0, %s97
      %s115 = sphi 0, %s115
      %s117 = sphi 0, %s115
      %s118 = sphi 0, %s117
      %s132 = sphi 0, %s118
      %s136 = sphi 0, %s136
      %s138 = sphi 0, %s136
      %s139 = sphi 0, %s138
      %s153 = sphi 0, %s139
      %s157 = sphi 0, %s157
      %s159 = sphi 0, %s157
      %s160 = sphi 0, %s159
      %s174 = sphi 0, %s160
      %s178 = sphi 0, %s178
      %s180 = sphi 0, %s178
      %s181 = sphi 0, %s180
      %s195 = sphi 0, %s181
      %s199 = sphi 0, %s199
      %s201 = sphi 0, %s199
      %s202 = sphi 0, %s201
      %s216 = sphi 0, %s202
      %s220 = sphi 0, %s220
      %s222 = sphi 0, %s220
      %s223 = sphi 0, %s222
      %s237 = sphi 0, %s223
      %s241 = sphi 0, %s241
      %s243 = sphi 0, %s241
      %s244 = sphi 0, %s243
      %s258 = sphi 0, %s244
      %s262 = sphi 0, %s262
      %s264 = sphi 0, %s262
      %s265 = sphi 0, %s264
      %s279 = sphi 0, %s265
      %s283 = sphi 0, %s283
      %s285 = sphi 0, %s283
      %s286 = sphi 0, %s285
      %s300 = sphi 0, %s286
      %s304 = sphi 0, %s304
      %s306 = sphi 0, %s304
      %s307 = sphi 0, %s306
      %s321 = sphi 0, %s307
      %s325 = sphi 0, %s325
      %s327 = sphi 0, %s325
      %s328 = sphi 0, %s327
      %s342 = sphi 0, %s328
      %s346 = sphi 0, %s346
      %s348 = sphi 0, %s346
      %s349 = sphi 0, %s348
      %s363 = sphi 0, %s349
      %s367 = sphi 0, %s367
      %s369 = sphi 0, %s367
      %s370 = sphi 0, %s369
      %s384 = sphi 0, %s370
      %s388 = sphi 0, %s388
      %s390 = sphi 0, %s388
      %s391 = sphi 0, %s390
      %s405 = sphi 0, %s391
      %s409 = sphi 0, %s409
      %s411 = sphi 0, %s409
      %s412 = sphi 0, %s411
      %s426 = sphi 0, %s412
      %s430 = sphi 0, %s430
      %s432 = sphi 0, %s430
      %s433 = sphi 0, %s432
      %s447 = sphi 0, %s433
      %s451 = sphi 0, %s451
      %s453 = sphi 0, %s451
      %s454 = sphi 0, %s453
      %s468 = sphi 0, %s454
      %s474 = sphi 0, %s476
      %s477 = sphi 0, %s474
      %s478 = sphi 0, %s477
      %s494 = sphi 0, %s478
      %s500 = sphi 0, %s502
      %s503 = sphi 0, %s500
      %s504 = sphi 0, %s503
      %s520 = sphi 0, %s504
    $region4: #{tpu_custom_call.1} parent=1 // loop_header_branch
      %37 = sbr.rel (%p35) target = $region8
    $region5: #{tpu_custom_call.1} parent=1 // loop_body
      %s39 = ssub.s32 %s34, 1
      %s40 = ssub.s32 %s34, 2
      %s41 = sadd.s32 %s34, 1
      %s42 = ssub.s32 %s34, %s41
      %p43 = scmp.eq.s32.totalorder %s42, 0
      %s45 = sadd.s32 %s44, 1
      %s46 = scalar_select %p43, %s44, %s45
      %p49 = pneg %p43
      %p50 = scmp.eq.s32.totalorder %s34, 1
      %p51 = por %p49, %p50
      %p52 = scmp.ne.s32.totalorder %s44, %s47
      %p53 = scmp.eq.s32.totalorder %s34, 0
      %p54 = por %p52, %p53
      %p55 = scmp.ne.s32.totalorder %s44, %s47
      %p56 = scmp.eq.s32.totalorder %s39, 1
      %p57 = por %p55, %p56
      %p58 = scmp.ne.s32.totalorder %s47, %s48
      %p59 = scmp.eq.s32.totalorder %s39, 0
      %p60 = por %p58, %p59
      %p61 = scmp.ne.s32.totalorder %s47, %s48
      %p62 = scmp.eq.s32.totalorder %s40, 1
      %p63 = por %p61, %p62
      %p65 = scmp.ne.s32.totalorder %s48, %s64
      %p66 = scmp.eq.s32.totalorder %s40, 0
      %p67 = por %p65, %p66
      %s68 = ssub.s32 %s34, %s41
      %p69 = scmp.eq.s32.totalorder %s68, 0
      %s71 = sadd.s32 %s70, 1
      %s72 = scalar_select %p69, %s70, %s71
      %p75 = pneg %p69
      %p76 = scmp.eq.s32.totalorder %s34, 1
      %p77 = por %p75, %p76
      %p78 = scmp.ne.s32.totalorder %s70, %s73
      %p79 = scmp.eq.s32.totalorder %s34, 0
      %p80 = por %p78, %p79
      %p81 = scmp.ne.s32.totalorder %s70, %s73
      %p82 = scmp.eq.s32.totalorder %s39, 1
      %p83 = por %p81, %p82
      %p84 = scmp.ne.s32.totalorder %s73, %s74
      %p85 = scmp.eq.s32.totalorder %s39, 0
      %p86 = por %p84, %p85
      %p87 = scmp.ne.s32.totalorder %s73, %s74
      %p88 = scmp.eq.s32.totalorder %s40, 1
      %p89 = por %p87, %p88
      %p91 = scmp.ne.s32.totalorder %s74, %s90
      %p92 = scmp.eq.s32.totalorder %s40, 0
      %p93 = por %p91, %p92
      %s95 = sadd.s32 %s94, 1
      %p98 = scmp.eq.s32.totalorder %s34, 1
      %p99 = scmp.ne.s32.totalorder %s94, %s96
      %p100 = scmp.eq.s32.totalorder %s34, 0
      %p101 = por %p99, %p100
      %p102 = scmp.ne.s32.totalorder %s94, %s96
      %p103 = scmp.eq.s32.totalorder %s39, 1
      %p104 = por %p102, %p103
      %p105 = scmp.ne.s32.totalorder %s96, %s97
      %p106 = scmp.eq.s32.totalorder %s39, 0
      %p107 = por %p105, %p106
      %p108 = scmp.ne.s32.totalorder %s96, %s97
      %p109 = scmp.eq.s32.totalorder %s40, 1
      %p110 = por %p108, %p109
      %p112 = scmp.ne.s32.totalorder %s97, %s111
      %p113 = scmp.eq.s32.totalorder %s40, 0
      %p114 = por %p112, %p113
      %s116 = sadd.s32 %s115, 1
      %p119 = scmp.eq.s32.totalorder %s34, 1
      %p120 = scmp.ne.s32.totalorder %s115, %s117
      %p121 = scmp.eq.s32.totalorder %s34, 0
      %p122 = por %p120, %p121
      %p123 = scmp.ne.s32.totalorder %s115, %s117
      %p124 = scmp.eq.s32.totalorder %s39, 1
      %p125 = por %p123, %p124
      %p126 = scmp.ne.s32.totalorder %s117, %s118
      %p127 = scmp.eq.s32.totalorder %s39, 0
      %p128 = por %p126, %p127
      %p129 = scmp.ne.s32.totalorder %s117, %s118
      %p130 = scmp.eq.s32.totalorder %s40, 1
      %p131 = por %p129, %p130
      %p133 = scmp.ne.s32.totalorder %s118, %s132
      %p134 = scmp.eq.s32.totalorder %s40, 0
      %p135 = por %p133, %p134
      %s137 = sadd.s32 %s136, 1
      %p140 = scmp.eq.s32.totalorder %s34, 1
      %p141 = scmp.ne.s32.totalorder %s136, %s138
      %p142 = scmp.eq.s32.totalorder %s34, 0
      %p143 = por %p141, %p142
      %p144 = scmp.ne.s32.totalorder %s136, %s138
      %p145 = scmp.eq.s32.totalorder %s39, 1
      %p146 = por %p144, %p145
      %p147 = scmp.ne.s32.totalorder %s138, %s139
      %p148 = scmp.eq.s32.totalorder %s39, 0
      %p149 = por %p147, %p148
      %p150 = scmp.ne.s32.totalorder %s138, %s139
      %p151 = scmp.eq.s32.totalorder %s40, 1
      %p152 = por %p150, %p151
      %p154 = scmp.ne.s32.totalorder %s139, %s153
      %p155 = scmp.eq.s32.totalorder %s40, 0
      %p156 = por %p154, %p155
      %s158 = sadd.s32 %s157, 1
      %p161 = scmp.eq.s32.totalorder %s34, 1
      %p162 = scmp.ne.s32.totalorder %s157, %s159
      %p163 = scmp.eq.s32.totalorder %s34, 0
      %p164 = por %p162, %p163
      %p165 = scmp.ne.s32.totalorder %s157, %s159
      %p166 = scmp.eq.s32.totalorder %s39, 1
      %p167 = por %p165, %p166
      %p168 = scmp.ne.s32.totalorder %s159, %s160
      %p169 = scmp.eq.s32.totalorder %s39, 0
      %p170 = por %p168, %p169
      %p171 = scmp.ne.s32.totalorder %s159, %s160
      %p172 = scmp.eq.s32.totalorder %s40, 1
      %p173 = por %p171, %p172
      %p175 = scmp.ne.s32.totalorder %s160, %s174
      %p176 = scmp.eq.s32.totalorder %s40, 0
      %p177 = por %p175, %p176
      %s179 = sadd.s32 %s178, 1
      %p182 = scmp.eq.s32.totalorder %s34, 1
      %p183 = scmp.ne.s32.totalorder %s178, %s180
      %p184 = scmp.eq.s32.totalorder %s34, 0
      %p185 = por %p183, %p184
      %p186 = scmp.ne.s32.totalorder %s178, %s180
      %p187 = scmp.eq.s32.totalorder %s39, 1
      %p188 = por %p186, %p187
      %p189 = scmp.ne.s32.totalorder %s180, %s181
      %p190 = scmp.eq.s32.totalorder %s39, 0
      %p191 = por %p189, %p190
      %p192 = scmp.ne.s32.totalorder %s180, %s181
      %p193 = scmp.eq.s32.totalorder %s40, 1
      %p194 = por %p192, %p193
      %p196 = scmp.ne.s32.totalorder %s181, %s195
      %p197 = scmp.eq.s32.totalorder %s40, 0
      %p198 = por %p196, %p197
      %s200 = sadd.s32 %s199, 1
      %p203 = scmp.eq.s32.totalorder %s34, 1
      %p204 = scmp.ne.s32.totalorder %s199, %s201
      %p205 = scmp.eq.s32.totalorder %s34, 0
      %p206 = por %p204, %p205
      %p207 = scmp.ne.s32.totalorder %s199, %s201
      %p208 = scmp.eq.s32.totalorder %s39, 1
      %p209 = por %p207, %p208
      %p210 = scmp.ne.s32.totalorder %s201, %s202
      %p211 = scmp.eq.s32.totalorder %s39, 0
      %p212 = por %p210, %p211
      %p213 = scmp.ne.s32.totalorder %s201, %s202
      %p214 = scmp.eq.s32.totalorder %s40, 1
      %p215 = por %p213, %p214
      %p217 = scmp.ne.s32.totalorder %s202, %s216
      %p218 = scmp.eq.s32.totalorder %s40, 0
      %p219 = por %p217, %p218
      %s221 = sadd.s32 %s220, 1
      %p224 = scmp.eq.s32.totalorder %s34, 1
      %p225 = scmp.ne.s32.totalorder %s220, %s222
      %p226 = scmp.eq.s32.totalorder %s34, 0
      %p227 = por %p225, %p226
      %p228 = scmp.ne.s32.totalorder %s220, %s222
      %p229 = scmp.eq.s32.totalorder %s39, 1
      %p230 = por %p228, %p229
      %p231 = scmp.ne.s32.totalorder %s222, %s223
      %p232 = scmp.eq.s32.totalorder %s39, 0
      %p233 = por %p231, %p232
      %p234 = scmp.ne.s32.totalorder %s222, %s223
      %p235 = scmp.eq.s32.totalorder %s40, 1
      %p236 = por %p234, %p235
      %p238 = scmp.ne.s32.totalorder %s223, %s237
      %p239 = scmp.eq.s32.totalorder %s40, 0
      %p240 = por %p238, %p239
      %s242 = sadd.s32 %s241, 1
      %p245 = scmp.eq.s32.totalorder %s34, 1
      %p246 = scmp.ne.s32.totalorder %s241, %s243
      %p247 = scmp.eq.s32.totalorder %s34, 0
      %p248 = por %p246, %p247
      %p249 = scmp.ne.s32.totalorder %s241, %s243
      %p250 = scmp.eq.s32.totalorder %s39, 1
      %p251 = por %p249, %p250
      %p252 = scmp.ne.s32.totalorder %s243, %s244
      %p253 = scmp.eq.s32.totalorder %s39, 0
      %p254 = por %p252, %p253
      %p255 = scmp.ne.s32.totalorder %s243, %s244
      %p256 = scmp.eq.s32.totalorder %s40, 1
      %p257 = por %p255, %p256
      %p259 = scmp.ne.s32.totalorder %s244, %s258
      %p260 = scmp.eq.s32.totalorder %s40, 0
      %p261 = por %p259, %p260
      %s263 = sadd.s32 %s262, 1
      %p266 = scmp.eq.s32.totalorder %s34, 1
      %p267 = scmp.ne.s32.totalorder %s262, %s264
      %p268 = scmp.eq.s32.totalorder %s34, 0
      %p269 = por %p267, %p268
      %p270 = scmp.ne.s32.totalorder %s262, %s264
      %p271 = scmp.eq.s32.totalorder %s39, 1
      %p272 = por %p270, %p271
      %p273 = scmp.ne.s32.totalorder %s264, %s265
      %p274 = scmp.eq.s32.totalorder %s39, 0
      %p275 = por %p273, %p274
      %p276 = scmp.ne.s32.totalorder %s264, %s265
      %p277 = scmp.eq.s32.totalorder %s40, 1
      %p278 = por %p276, %p277
      %p280 = scmp.ne.s32.totalorder %s265, %s279
      %p281 = scmp.eq.s32.totalorder %s40, 0
      %p282 = por %p280, %p281
      %s284 = sadd.s32 %s283, 1
      %p287 = scmp.eq.s32.totalorder %s34, 1
      %p288 = scmp.ne.s32.totalorder %s283, %s285
      %p289 = scmp.eq.s32.totalorder %s34, 0
      %p290 = por %p288, %p289
      %p291 = scmp.ne.s32.totalorder %s283, %s285
      %p292 = scmp.eq.s32.totalorder %s39, 1
      %p293 = por %p291, %p292
      %p294 = scmp.ne.s32.totalorder %s285, %s286
      %p295 = scmp.eq.s32.totalorder %s39, 0
      %p296 = por %p294, %p295
      %p297 = scmp.ne.s32.totalorder %s285, %s286
      %p298 = scmp.eq.s32.totalorder %s40, 1
      %p299 = por %p297, %p298
      %p301 = scmp.ne.s32.totalorder %s286, %s300
      %p302 = scmp.eq.s32.totalorder %s40, 0
      %p303 = por %p301, %p302
      %s305 = sadd.s32 %s304, 1
      %p308 = scmp.eq.s32.totalorder %s34, 1
      %p309 = scmp.ne.s32.totalorder %s304, %s306
      %p310 = scmp.eq.s32.totalorder %s34, 0
      %p311 = por %p309, %p310
      %p312 = scmp.ne.s32.totalorder %s304, %s306
      %p313 = scmp.eq.s32.totalorder %s39, 1
      %p314 = por %p312, %p313
      %p315 = scmp.ne.s32.totalorder %s306, %s307
      %p316 = scmp.eq.s32.totalorder %s39, 0
      %p317 = por %p315, %p316
      %p318 = scmp.ne.s32.totalorder %s306, %s307
      %p319 = scmp.eq.s32.totalorder %s40, 1
      %p320 = por %p318, %p319
      %p322 = scmp.ne.s32.totalorder %s307, %s321
      %p323 = scmp.eq.s32.totalorder %s40, 0
      %p324 = por %p322, %p323
      %s326 = sadd.s32 %s325, 1
      %p329 = scmp.eq.s32.totalorder %s34, 1
      %p330 = scmp.ne.s32.totalorder %s325, %s327
      %p331 = scmp.eq.s32.totalorder %s34, 0
      %p332 = por %p330, %p331
      %p333 = scmp.ne.s32.totalorder %s325, %s327
      %p334 = scmp.eq.s32.totalorder %s39, 1
      %p335 = por %p333, %p334
      %p336 = scmp.ne.s32.totalorder %s327, %s328
      %p337 = scmp.eq.s32.totalorder %s39, 0
      %p338 = por %p336, %p337
      %p339 = scmp.ne.s32.totalorder %s327, %s328
      %p340 = scmp.eq.s32.totalorder %s40, 1
      %p341 = por %p339, %p340
      %p343 = scmp.ne.s32.totalorder %s328, %s342
      %p344 = scmp.eq.s32.totalorder %s40, 0
      %p345 = por %p343, %p344
      %s347 = sadd.s32 %s346, 1
      %p350 = scmp.eq.s32.totalorder %s34, 1
      %p351 = scmp.ne.s32.totalorder %s346, %s348
      %p352 = scmp.eq.s32.totalorder %s34, 0
      %p353 = por %p351, %p352
      %p354 = scmp.ne.s32.totalorder %s346, %s348
      %p355 = scmp.eq.s32.totalorder %s39, 1
      %p356 = por %p354, %p355
      %p357 = scmp.ne.s32.totalorder %s348, %s349
      %p358 = scmp.eq.s32.totalorder %s39, 0
      %p359 = por %p357, %p358
      %p360 = scmp.ne.s32.totalorder %s348, %s349
      %p361 = scmp.eq.s32.totalorder %s40, 1
      %p362 = por %p360, %p361
      %p364 = scmp.ne.s32.totalorder %s349, %s363
      %p365 = scmp.eq.s32.totalorder %s40, 0
      %p366 = por %p364, %p365
      %s368 = sadd.s32 %s367, 1
      %p371 = scmp.eq.s32.totalorder %s34, 1
      %p372 = scmp.ne.s32.totalorder %s367, %s369
      %p373 = scmp.eq.s32.totalorder %s34, 0
      %p374 = por %p372, %p373
      %p375 = scmp.ne.s32.totalorder %s367, %s369
      %p376 = scmp.eq.s32.totalorder %s39, 1
      %p377 = por %p375, %p376
      %p378 = scmp.ne.s32.totalorder %s369, %s370
      %p379 = scmp.eq.s32.totalorder %s39, 0
      %p380 = por %p378, %p379
      %p381 = scmp.ne.s32.totalorder %s369, %s370
      %p382 = scmp.eq.s32.totalorder %s40, 1
      %p383 = por %p381, %p382
      %p385 = scmp.ne.s32.totalorder %s370, %s384
      %p386 = scmp.eq.s32.totalorder %s40, 0
      %p387 = por %p385, %p386
      %s389 = sadd.s32 %s388, 1
      %p392 = scmp.eq.s32.totalorder %s34, 1
      %p393 = scmp.ne.s32.totalorder %s388, %s390
      %p394 = scmp.eq.s32.totalorder %s34, 0
      %p395 = por %p393, %p394
      %p396 = scmp.ne.s32.totalorder %s388, %s390
      %p397 = scmp.eq.s32.totalorder %s39, 1
      %p398 = por %p396, %p397
      %p399 = scmp.ne.s32.totalorder %s390, %s391
      %p400 = scmp.eq.s32.totalorder %s39, 0
      %p401 = por %p399, %p400
      %p402 = scmp.ne.s32.totalorder %s390, %s391
      %p403 = scmp.eq.s32.totalorder %s40, 1
      %p404 = por %p402, %p403
      %p406 = scmp.ne.s32.totalorder %s391, %s405
      %p407 = scmp.eq.s32.totalorder %s40, 0
      %p408 = por %p406, %p407
      %s410 = sadd.s32 %s409, 1
      %p413 = scmp.eq.s32.totalorder %s34, 1
      %p414 = scmp.ne.s32.totalorder %s409, %s411
      %p415 = scmp.eq.s32.totalorder %s34, 0
      %p416 = por %p414, %p415
      %p417 = scmp.ne.s32.totalorder %s409, %s411
      %p418 = scmp.eq.s32.totalorder %s39, 1
      %p419 = por %p417, %p418
      %p420 = scmp.ne.s32.totalorder %s411, %s412
      %p421 = scmp.eq.s32.totalorder %s39, 0
      %p422 = por %p420, %p421
      %p423 = scmp.ne.s32.totalorder %s411, %s412
      %p424 = scmp.eq.s32.totalorder %s40, 1
      %p425 = por %p423, %p424
      %p427 = scmp.ne.s32.totalorder %s412, %s426
      %p428 = scmp.eq.s32.totalorder %s40, 0
      %p429 = por %p427, %p428
      %s431 = sadd.s32 %s430, 1
      %p434 = scmp.eq.s32.totalorder %s34, 1
      %p435 = scmp.ne.s32.totalorder %s430, %s432
      %p436 = scmp.eq.s32.totalorder %s34, 0
      %p437 = por %p435, %p436
      %p438 = scmp.ne.s32.totalorder %s430, %s432
      %p439 = scmp.eq.s32.totalorder %s39, 1
      %p440 = por %p438, %p439
      %p441 = scmp.ne.s32.totalorder %s432, %s433
      %p442 = scmp.eq.s32.totalorder %s39, 0
      %p443 = por %p441, %p442
      %p444 = scmp.ne.s32.totalorder %s432, %s433
      %p445 = scmp.eq.s32.totalorder %s40, 1
      %p446 = por %p444, %p445
      %p448 = scmp.ne.s32.totalorder %s433, %s447
      %p449 = scmp.eq.s32.totalorder %s40, 0
      %p450 = por %p448, %p449
      %s452 = sadd.s32 %s451, 1
      %p455 = scmp.eq.s32.totalorder %s34, 1
      %p456 = scmp.ne.s32.totalorder %s451, %s453
      %p457 = scmp.eq.s32.totalorder %s34, 0
      %p458 = por %p456, %p457
      %p459 = scmp.ne.s32.totalorder %s451, %s453
      %p460 = scmp.eq.s32.totalorder %s39, 1
      %p461 = por %p459, %p460
      %p462 = scmp.ne.s32.totalorder %s453, %s454
      %p463 = scmp.eq.s32.totalorder %s39, 0
      %p464 = por %p462, %p463
      %p465 = scmp.ne.s32.totalorder %s453, %s454
      %p466 = scmp.eq.s32.totalorder %s40, 1
      %p467 = por %p465, %p466
      %p469 = scmp.ne.s32.totalorder %s454, %s468
      %p470 = scmp.eq.s32.totalorder %s40, 0
      %p471 = por %p469, %p470
      %s472 = ssub.s32 %s34, %s41
      %p473 = scmp.eq.s32.totalorder %s472, 0
      %s475 = sadd.s32 %s474, 1
      %s476 = scalar_select %p473, %s474, %s475
      %p479 = pneg %p473
      %p480 = scmp.eq.s32.totalorder %s34, 1
      %p481 = por %p479, %p480
      %p482 = scmp.ne.s32.totalorder %s474, %s477
      %p483 = scmp.eq.s32.totalorder %s34, 0
      %p484 = por %p482, %p483
      %p485 = scmp.ne.s32.totalorder %s474, %s477
      %p486 = scmp.eq.s32.totalorder %s39, 1
      %p487 = por %p485, %p486
      %p488 = scmp.ne.s32.totalorder %s477, %s478
      %p489 = scmp.eq.s32.totalorder %s39, 0
      %p490 = por %p488, %p489
      %p491 = scmp.ne.s32.totalorder %s477, %s478
      %p492 = scmp.eq.s32.totalorder %s40, 1
      %p493 = por %p491, %p492
      %p495 = scmp.ne.s32.totalorder %s478, %s494
      %p496 = scmp.eq.s32.totalorder %s40, 0
      %p497 = por %p495, %p496
      %s498 = ssub.s32 %s34, %s41
      %p499 = scmp.eq.s32.totalorder %s498, 0
      %s501 = sadd.s32 %s500, 1
      %s502 = scalar_select %p499, %s500, %s501
      %p505 = pneg %p499
      %p506 = scmp.eq.s32.totalorder %s34, 1
      %p507 = por %p505, %p506
      %p508 = scmp.ne.s32.totalorder %s500, %s503
      %p509 = scmp.eq.s32.totalorder %s34, 0
      %p510 = por %p508, %p509
      %p511 = scmp.ne.s32.totalorder %s500, %s503
      %p512 = scmp.eq.s32.totalorder %s39, 1
      %p513 = por %p511, %p512
      %p514 = scmp.ne.s32.totalorder %s503, %s504
      %p515 = scmp.eq.s32.totalorder %s39, 0
      %p516 = por %p514, %p515
      %p517 = scmp.ne.s32.totalorder %s503, %s504
      %p518 = scmp.eq.s32.totalorder %s40, 1
      %p519 = por %p517, %p518
      %p521 = scmp.ne.s32.totalorder %s504, %s520
      %p522 = scmp.eq.s32.totalorder %s40, 0
      %p523 = por %p521, %p522
      %p524 = scmp.le.s32.totalorder 1, %s34
      %p525 = scmp.lt.s32.totalorder %s34, 3
      %p526 = pnand %p524, %p525
      %p527 = pneg %p526
      // Predicated region
      $region9: #{tpu_custom_call.1} parent=5 // pred_check
        _
      $region10: #{tpu_custom_call.1} parent=5 // pred_check_branch
        %529 = sbr.rel (%p526) target = $region12
      $region11: #{tpu_custom_call.1} parent=5 // pred_region
        %s530 = ssub.s32 %s34, 1
        // Predicated region
        $region13: #{tpu_custom_call.1} parent=11 // pred_check
          %p531 = pneg %p107
        $region14: #{tpu_custom_call.1} parent=11 // pred_check_branch
          %533 = sbr.rel (%p531) target = $region16
        $region15: #{tpu_custom_call.1} parent=11 // pred_region
          _
        $region16: #{tpu_custom_call.1} parent=11 // pred_fallthru
          _
        // Predicated region
        $region17: #{tpu_custom_call.1} parent=11 // pred_check
          %p534 = pneg %p128
        $region18: #{tpu_custom_call.1} parent=11 // pred_check_branch
          %536 = sbr.rel (%p534) target = $region20
        $region19: #{tpu_custom_call.1} parent=11 // pred_region
          _
        $region20: #{tpu_custom_call.1} parent=11 // pred_fallthru
          _
        // Predicated region
        $region21: #{tpu_custom_call.1} parent=11 // pred_check
          %p537 = pneg %p149
        $region22: #{tpu_custom_call.1} parent=11 // pred_check_branch
          %539 = sbr.rel (%p537) target = $region24
        $region23: #{tpu_custom_call.1} parent=11 // pred_region
          _
        $region24: #{tpu_custom_call.1} parent=11 // pred_fallthru
          _
        // Predicated region
        $region25: #{tpu_custom_call.1} parent=11 // pred_check
          %p540 = pneg %p170
        $region26: #{tpu_custom_call.1} parent=11 // pred_check_branch
          %542 = sbr.rel (%p540) target = $region28
        $region27: #{tpu_custom_call.1} parent=11 // pred_region
          _
        $region28: #{tpu_custom_call.1} parent=11 // pred_fallthru
          _
        // Predicated region
        $region29: #{tpu_custom_call.1} parent=11 // pred_check
          %p543 = pneg %p191
        $region30: #{tpu_custom_call.1} parent=11 // pred_check_branch
          %545 = sbr.rel (%p543) target = $region32
        $region31: #{tpu_custom_call.1} parent=11 // pred_region
          _
        $region32: #{tpu_custom_call.1} parent=11 // pred_fallthru
          _
        // Predicated region
        $region33: #{tpu_custom_call.1} parent=11 // pred_check
          %p546 = pneg %p212
        $region34: #{tpu_custom_call.1} parent=11 // pred_check_branch
          %548 = sbr.rel (%p546) target = $region36
        $region35: #{tpu_custom_call.1} parent=11 // pred_region
          _
        $region36: #{tpu_custom_call.1} parent=11 // pred_fallthru
          _
        // Predicated region
        $region37: #{tpu_custom_call.1} parent=11 // pred_check
          %p549 = pneg %p233
        $region38: #{tpu_custom_call.1} parent=11 // pred_check_branch
          %551 = sbr.rel (%p549) target = $region40
        $region39: #{tpu_custom_call.1} parent=11 // pred_region
          _
        $region40: #{tpu_custom_call.1} parent=11 // pred_fallthru
          _
        // Predicated region
        $region41: #{tpu_custom_call.1} parent=11 // pred_check
          %p552 = pneg %p254
        $region42: #{tpu_custom_call.1} parent=11 // pred_check_branch
          %554 = sbr.rel (%p552) target = $region44
        $region43: #{tpu_custom_call.1} parent=11 // pred_region
          _
        $region44: #{tpu_custom_call.1} parent=11 // pred_fallthru
          _
        // Predicated region
        $region45: #{tpu_custom_call.1} parent=11 // pred_check
          %p555 = pneg %p275
        $region46: #{tpu_custom_call.1} parent=11 // pred_check_branch
          %557 = sbr.rel (%p555) target = $region48
        $region47: #{tpu_custom_call.1} parent=11 // pred_region
          _
        $region48: #{tpu_custom_call.1} parent=11 // pred_fallthru
          _
        // Predicated region
        $region49: #{tpu_custom_call.1} parent=11 // pred_check
          %p558 = pneg %p296
        $region50: #{tpu_custom_call.1} parent=11 // pred_check_branch
          %560 = sbr.rel (%p558) target = $region52
        $region51: #{tpu_custom_call.1} parent=11 // pred_region
          _
        $region52: #{tpu_custom_call.1} parent=11 // pred_fallthru
          _
        // Predicated region
        $region53: #{tpu_custom_call.1} parent=11 // pred_check
          %p561 = pneg %p317
        $region54: #{tpu_custom_call.1} parent=11 // pred_check_branch
          %563 = sbr.rel (%p561) target = $region56
        $region55: #{tpu_custom_call.1} parent=11 // pred_region
          _
        $region56: #{tpu_custom_call.1} parent=11 // pred_fallthru
          _
        // Predicated region
        $region57: #{tpu_custom_call.1} parent=11 // pred_check
          %p564 = pneg %p338
        $region58: #{tpu_custom_call.1} parent=11 // pred_check_branch
          %566 = sbr.rel (%p564) target = $region60
        $region59: #{tpu_custom_call.1} parent=11 // pred_region
          _
        $region60: #{tpu_custom_call.1} parent=11 // pred_fallthru
          _
        // Predicated region
        $region61: #{tpu_custom_call.1} parent=11 // pred_check
          %p567 = pneg %p359
        $region62: #{tpu_custom_call.1} parent=11 // pred_check_branch
          %569 = sbr.rel (%p567) target = $region64
        $region63: #{tpu_custom_call.1} parent=11 // pred_region
          _
        $region64: #{tpu_custom_call.1} parent=11 // pred_fallthru
          _
        // Predicated region
        $region65: #{tpu_custom_call.1} parent=11 // pred_check
          %p570 = pneg %p380
        $region66: #{tpu_custom_call.1} parent=11 // pred_check_branch
          %572 = sbr.rel (%p570) target = $region68
        $region67: #{tpu_custom_call.1} parent=11 // pred_region
          _
        $region68: #{tpu_custom_call.1} parent=11 // pred_fallthru
          _
        // Predicated region
        $region69: #{tpu_custom_call.1} parent=11 // pred_check
          %p573 = pneg %p401
        $region70: #{tpu_custom_call.1} parent=11 // pred_check_branch
          %575 = sbr.rel (%p573) target = $region72
        $region71: #{tpu_custom_call.1} parent=11 // pred_region
          _
        $region72: #{tpu_custom_call.1} parent=11 // pred_fallthru
          _
        // Predicated region
        $region73: #{tpu_custom_call.1} parent=11 // pred_check
          %p576 = pneg %p422
        $region74: #{tpu_custom_call.1} parent=11 // pred_check_branch
          %578 = sbr.rel (%p576) target = $region76
        $region75: #{tpu_custom_call.1} parent=11 // pred_region
          _
        $region76: #{tpu_custom_call.1} parent=11 // pred_fallthru
          _
        // Predicated region
        $region77: #{tpu_custom_call.1} parent=11 // pred_check
          %p579 = pneg %p443
        $region78: #{tpu_custom_call.1} parent=11 // pred_check_branch
          %581 = sbr.rel (%p579) target = $region80
        $region79: #{tpu_custom_call.1} parent=11 // pred_region
          _
        $region80: #{tpu_custom_call.1} parent=11 // pred_fallthru
          _
        // Predicated region
        $region81: #{tpu_custom_call.1} parent=11 // pred_check
          %p582 = pneg %p464
        $region82: #{tpu_custom_call.1} parent=11 // pred_check_branch
          %584 = sbr.rel (%p582) target = $region84
        $region83: #{tpu_custom_call.1} parent=11 // pred_region
          _
        $region84: #{tpu_custom_call.1} parent=11 // pred_fallthru
          _
      $region12: #{tpu_custom_call.1} parent=5 // pred_fallthru
        _
      %p585 = scmp.lt.s32.totalorder %s34, 2
      // Predicated region
      $region85: #{tpu_custom_call.1} parent=5 // pred_check
        %p586 = pneg %p585
      $region86: #{tpu_custom_call.1} parent=5 // pred_check_branch
        %588 = sbr.rel (%p586) target = $region88
      $region87: #{tpu_custom_call.1} parent=5 // pred_region
        // Predicated region
        $region89: #{tpu_custom_call.1} parent=87 // pred_check
          %p589 = pneg %p54
        $region90: #{tpu_custom_call.1} parent=87 // pred_check_branch
          %591 = sbr.rel (%p589) target = $region92
        $region91: #{tpu_custom_call.1} parent=87 // pred_region
          %p592 = scmp.lt.s32.totalorder %s34, 1
          %s593 = scalar_select %p592, %s34, 1
          %s594 = smul.addr %s593, 8
          %s595 = scalar_lea.vmem %s0, %s594
        $region92: #{tpu_custom_call.1} parent=87 // pred_fallthru
          _
        // Predicated region
        $region93: #{tpu_custom_call.1} parent=87 // pred_check
          %p596 = pneg %p80
        $region94: #{tpu_custom_call.1} parent=87 // pred_check_branch
          %598 = sbr.rel (%p596) target = $region96
        $region95: #{tpu_custom_call.1} parent=87 // pred_region
          %p599 = scmp.lt.s32.totalorder %s34, 1
          %s600 = scalar_select %p599, %s34, 1
          %s601 = smul.addr %s600, 8
          %s602 = scalar_lea.vmem %s1, %s601
        $region96: #{tpu_custom_call.1} parent=87 // pred_fallthru
          _
      $region88: #{tpu_custom_call.1} parent=5 // pred_fallthru
        _
      %p603 = scmp.le.s32.totalorder 1, %s34
      %p604 = scmp.lt.s32.totalorder %s34, 3
      %p605 = pnand %p603, %p604
      %p606 = pneg %p605
      // Predicated region
      $region97: #{tpu_custom_call.1} parent=5 // pred_check
        _
      $region98: #{tpu_custom_call.1} parent=5 // pred_check_branch
        %608 = sbr.rel (%p605) target = $region100
      $region99: #{tpu_custom_call.1} parent=5 // pred_region
        %s609 = ssub.s32 %s34, 1
        %p610 = scmp.lt.s32.totalorder %s39, 1
        %s611 = scalar_select %p610, %s39, 1
        %s612 = smul.addr %s611, 8
        %s613 = scalar_lea.vmem %s0, %s612
        %p614 = pneg %p60
        %p615 = pneg %p57
        %p616 = scmp.lt.s32.totalorder %s39, 1
        %s617 = scalar_select %p616, %s39, 1
        %s618 = smul.addr %s617, 8
        %s619 = scalar_lea.vmem %s1, %s618
        %p620 = pneg %p86
        %p621 = pneg %p83
        %p622 = pneg %p107
        %p623 = pneg %p104
        %p624 = pneg %p128
        %p625 = pneg %p125
        %p626 = pneg %p149
        %p627 = pneg %p146
        %p628 = pneg %p170
        %p629 = pneg %p167
        %p630 = pneg %p191
        %p631 = pneg %p188
        %p632 = pneg %p212
        %p633 = pneg %p209
        %p634 = pneg %p233
        %p635 = pneg %p230
        %p636 = pneg %p254
        %p637 = pneg %p251
        %p638 = pneg %p275
        %p639 = pneg %p272
        %p640 = pneg %p296
        %p641 = pneg %p293
        %p642 = pneg %p317
        %p643 = pneg %p314
        %p644 = pneg %p338
        %p645 = pneg %p335
        %p646 = pneg %p359
        %p647 = pneg %p356
        %p648 = pneg %p380
        %p649 = pneg %p377
        %p650 = pneg %p401
        %p651 = pneg %p398
        %p652 = pneg %p422
        %p653 = pneg %p419
        %p654 = pneg %p443
        %p655 = pneg %p440
        %p656 = pneg %p464
        %p657 = pneg %p461
        %p658 = pneg %p490
        %p659 = pneg %p487
        %s660 = sand.u32 %s477, 1
        %s661 = scalar_lea.sflag [#allocation3], %s660
        %s662 = sand.u32 %s477, 1
        %s663 = smul.addr %s662, 8
        %s664 = scalar_lea.vmem [#allocation2], %s663
        %p665 = pneg %p516
        %p666 = pneg %p513
        %s667 = sand.u32 %s503, 1
        %s668 = scalar_lea.sflag [#allocation5], %s667
        %s669 = sand.u32 %s503, 1
        %s670 = smul.addr %s669, 8
        %s671 = scalar_lea.vmem [#allocation4], %s670
        %p672 = scmp.lt.s32.totalorder %s39, 1
        %s673 = scalar_select %p672, %s39, 1
        %s674 = smul.addr %s673, 8
        %s675 = scalar_lea.vmem %s0, %s674
        %p676 = scmp.lt.s32.totalorder %s39, 1
        %s677 = scalar_select %p676, %s39, 1
        %s678 = smul.addr %s677, 8
        %s679 = scalar_lea.vmem %s1, %s678
        %v680 = vld [vmem:[%s675] sm:$0xff]
        %v681 = vld [vmem:[%s2] sm:$0xff]
        %v682 = vld [vmem:[%s2 + $0x8] sm:$0xff]
        %v683 = vld [vmem:[%s2 + $0x10] sm:$0xff]
        %v684 = vld [vmem:[%s2 + $0x18] sm:$0xff]
        %v685 = vld [vmem:[%s3] sm:$0x1]
        %v687 = vlaneseq
        %v688 = vshrl.u32 %v687, 7
        %v689 = vsub.s32 0, %v688
        %v690 = vrot.slane %v685, %v689
        %vm692 = vcmask 261120
        %v694 = vsel %vm692, %v680, 0
        %696 = vmatprep.subr.mxu0 0.0
        %697 = vmatpush1.msra.mxu0 0.0
        %698 = vmatprep.subr.mxu0 0.0
        %699 = vmatpush1.msra.mxu0 0.0
        %700 = vmatprep.subr.mxu0 0.0
        %701 = vmatpush1.msra.mxu0 0.0
        %702 = vmatprep.subr.mxu0 0.0
        %703 = vmatpush1.msra.mxu0 0.0
        %704 = vmatprep.subr.mxu0 0.0
        %705 = vmatpush1.msra.mxu0 0.0
        %706 = vmatprep.subr.mxu0 0.0
        %707 = vmatpush1.msra.mxu0 0.0
        %708 = vmatprep.subr.mxu0 0.0
        %709 = vmatpush1.msra.mxu0 0.0
        %710 = vmatprep.subr.mxu0 0.0
        %711 = vmatpush1.msra.mxu0 0.0
        %712 = vmatprep.subr.mxu0 0.0
        %713 = vmatpush1.msra.mxu0 0.0
        %714 = vmatprep.subr.mxu0 0.0
        %715 = vmatpush1.msra.mxu0 0.0
        %716 = vmatprep.subr.mxu0 0.0
        %717 = vmatpush1.msra.mxu0 0.0
        %718 = vmatprep.subr.mxu0 0.0
        %719 = vmatpush1.msra.mxu0 0.0
        %720 = vmatprep.subr.mxu0 0.0
        %721 = vmatpush1.msra.mxu0 %v684
        %722 = vmatprep.subr.mxu0 0.0
        %723 = vmatpush1.msra.mxu0 %v683
        %724 = vmatprep.subr.mxu0 0.0
        %725 = vmatpush1.msra.mxu0 %v682
        %726 = vmatprep.subr.mxu0 0.0
        %727 = vmatpush1.msra.mxu0 %v681
        %728 = vmatprep.subr.mxu0 0.0
        %729 = vmatpush2.msra.mxu0 0.0
        %730 = vmatprep.subr.mxu0 0.0
        %731 = vmatpush2.msra.mxu0 0.0
        %732 = vmatprep.subr.mxu0 0.0
        %733 = vmatpush2.msra.mxu0 0.0
        %734 = vmatprep.subr.mxu0 0.0
        %735 = vmatpush2.msra.mxu0 0.0
        %736 = vmatprep.subr.mxu0 0.0
        %737 = vmatpush2.msra.mxu0 0.0
        %738 = vmatprep.subr.mxu0 0.0
        %739 = vmatpush2.msra.mxu0 0.0
        %740 = vmatprep.subr.mxu0 0.0
        %741 = vmatpush2.msra.mxu0 0.0
        %742 = vmatprep.subr.mxu0 0.0
        %743 = vmatpush2.msra.mxu0 0.0
        %744 = vmatprep.subr.mxu0 0.0
        %745 = vmatpush2.msra.mxu0 0.0
        %746 = vmatprep.subr.mxu0 0.0
        %747 = vmatpush2.msra.mxu0 0.0
        %748 = vmatprep.subr.mxu0 0.0
        %749 = vmatpush2.msra.mxu0 0.0
        %750 = vmatprep.subr.mxu0 0.0
        %751 = vmatpush2.msra.mxu0 0.0
        %752 = vmatprep.subr.mxu0 0.0
        %753 = vmatpush2.msra.mxu0 0.0
        %754 = vmatprep.subr.mxu0 0.0
        %755 = vmatpush2.msra.mxu0 0.0
        %756 = vmatprep.subr.mxu0 0.0
        %757 = vmatpush2.msra.mxu0 0.0
        %758 = vmatprep.subr.mxu0 0.0
        %759 = vmatpush2.msra.mxu0 0.0
        %760 = vmatprep.mubr.f32.mxu0 0.0
        %761 = vmatmul.mubr.f32.gmra.mxu0 %v694
        %v762 = vpop.f32.mrf.mxu0
        %v763 = vadd.f32 %v690, %v762
        %v764 = vpop.f32.mrf.mxu0
        %765 = vdwg.mxu0
        %v766 = vmul.f32 %v763, 0.01
        %v767 = vmax.f32 %v763, %v766
        %v768 = vld [vmem:[%s4] sm:$0xff]
        %v769 = vld [vmem:[%s4 + $0x8] sm:$0xff]
        %v770 = vld [vmem:[%s4 + $0x10] sm:$0xff]
        %v771 = vld [vmem:[%s4 + $0x18] sm:$0xff]
        %v772 = vld [vmem:[%s4 + $0x20] sm:$0xff]
        %v773 = vld [vmem:[%s4 + $0x28] sm:$0xff]
        %v774 = vld [vmem:[%s4 + $0x30] sm:$0xff]
        %v775 = vld [vmem:[%s4 + $0x38] sm:$0xff]
        %v776 = vld [vmem:[%s5] sm:$0x1]
        %v778 = vlaneseq
        %v779 = vshrl.u32 %v778, 7
        %v780 = vsub.s32 0, %v779
        %v781 = vrot.slane %v776, %v780
        %vm783 = vcmask 523264
        %v785 = vsel %vm783, %v767, 0
        %787 = vmatprep.subr.mxu0 0.0
        %788 = vmatpush1.msra.mxu0 0.0
        %789 = vmatprep.subr.mxu0 0.0
        %790 = vmatpush1.msra.mxu0 0.0
        %791 = vmatprep.subr.mxu0 0.0
        %792 = vmatpush1.msra.mxu0 0.0
        %793 = vmatprep.subr.mxu0 0.0
        %794 = vmatpush1.msra.mxu0 0.0
        %795 = vmatprep.subr.mxu0 0.0
        %796 = vmatpush1.msra.mxu0 0.0
        %797 = vmatprep.subr.mxu0 0.0
        %798 = vmatpush1.msra.mxu0 0.0
        %799 = vmatprep.subr.mxu0 0.0
        %800 = vmatpush1.msra.mxu0 0.0
        %801 = vmatprep.subr.mxu0 0.0
        %802 = vmatpush1.msra.mxu0 0.0
        %803 = vmatprep.subr.mxu0 0.0
        %804 = vmatpush1.msra.mxu0 %v775
        %805 = vmatprep.subr.mxu0 0.0
        %806 = vmatpush1.msra.mxu0 %v774
        %807 = vmatprep.subr.mxu0 0.0
        %808 = vmatpush1.msra.mxu0 %v773
        %809 = vmatprep.subr.mxu0 0.0
        %810 = vmatpush1.msra.mxu0 %v772
        %811 = vmatprep.subr.mxu0 0.0
        %812 = vmatpush1.msra.mxu0 %v771
        %813 = vmatprep.subr.mxu0 0.0
        %814 = vmatpush1.msra.mxu0 %v770
        %815 = vmatprep.subr.mxu0 0.0
        %816 = vmatpush1.msra.mxu0 %v769
        %817 = vmatprep.subr.mxu0 0.0
        %818 = vmatpush1.msra.mxu0 %v768
        %819 = vmatprep.subr.mxu0 0.0
        %820 = vmatpush2.msra.mxu0 0.0
        %821 = vmatprep.subr.mxu0 0.0
        %822 = vmatpush2.msra.mxu0 0.0
        %823 = vmatprep.subr.mxu0 0.0
        %824 = vmatpush2.msra.mxu0 0.0
        %825 = vmatprep.subr.mxu0 0.0
        %826 = vmatpush2.msra.mxu0 0.0
        %827 = vmatprep.subr.mxu0 0.0
        %828 = vmatpush2.msra.mxu0 0.0
        %829 = vmatprep.subr.mxu0 0.0
        %830 = vmatpush2.msra.mxu0 0.0
        %831 = vmatprep.subr.mxu0 0.0
        %832 = vmatpush2.msra.mxu0 0.0
        %833 = vmatprep.subr.mxu0 0.0
        %834 = vmatpush2.msra.mxu0 0.0
        %835 = vmatprep.subr.mxu0 0.0
        %836 = vmatpush2.msra.mxu0 0.0
        %837 = vmatprep.subr.mxu0 0.0
        %838 = vmatpush2.msra.mxu0 0.0
        %839 = vmatprep.subr.mxu0 0.0
        %840 = vmatpush2.msra.mxu0 0.0
        %841 = vmatprep.subr.mxu0 0.0
        %842 = vmatpush2.msra.mxu0 0.0
        %843 = vmatprep.subr.mxu0 0.0
        %844 = vmatpush2.msra.mxu0 0.0
        %845 = vmatprep.subr.mxu0 0.0
        %846 = vmatpush2.msra.mxu0 0.0
        %847 = vmatprep.subr.mxu0 0.0
        %848 = vmatpush2.msra.mxu0 0.0
        %849 = vmatprep.subr.mxu0 0.0
        %850 = vmatpush2.msra.mxu0 0.0
        %851 = vmatprep.mubr.f32.mxu0 0.0
        %852 = vmatmul.mubr.f32.gmra.mxu0 %v785
        %v853 = vpop.f32.mrf.mxu0
        %v854 = vadd.f32 %v781, %v853
        %v855 = vpop.f32.mrf.mxu0
        %856 = vdwg.mxu0
        %v857 = vmul.f32 %v854, 0.01
        %v858 = vmax.f32 %v854, %v857
        %v859 = vld [vmem:[%s6] sm:$0xff]
        %v860 = vld [vmem:[%s6 + $0x8] sm:$0xff]
        %v861 = vld [vmem:[%s6 + $0x10] sm:$0xff]
        %v862 = vld [vmem:[%s6 + $0x18] sm:$0xff]
        %v863 = vld [vmem:[%s6 + $0x20] sm:$0xff]
        %v864 = vld [vmem:[%s6 + $0x28] sm:$0xff]
        %v865 = vld [vmem:[%s7] sm:$0x1]
        %v867 = vlaneseq
        %v868 = vshrl.u32 %v867, 7
        %v869 = vsub.s32 0, %v868
        %v870 = vrot.slane %v865, %v869
        %vm872 = vcmask 392192
        %v874 = vsel %vm872, %v858, 0
        %876 = vmatprep.subr.mxu0 0.0
        %877 = vmatpush1.msra.mxu0 0.0
        %878 = vmatprep.subr.mxu0 0.0
        %879 = vmatpush1.msra.mxu0 0.0
        %880 = vmatprep.subr.mxu0 0.0
        %881 = vmatpush1.msra.mxu0 0.0
        %882 = vmatprep.subr.mxu0 0.0
        %883 = vmatpush1.msra.mxu0 0.0
        %884 = vmatprep.subr.mxu0 0.0
        %885 = vmatpush1.msra.mxu0 0.0
        %886 = vmatprep.subr.mxu0 0.0
        %887 = vmatpush1.msra.mxu0 0.0
        %888 = vmatprep.subr.mxu0 0.0
        %889 = vmatpush1.msra.mxu0 0.0
        %890 = vmatprep.subr.mxu0 0.0
        %891 = vmatpush1.msra.mxu0 0.0
        %892 = vmatprep.subr.mxu0 0.0
        %893 = vmatpush1.msra.mxu0 0.0
        %894 = vmatprep.subr.mxu0 0.0
        %895 = vmatpush1.msra.mxu0 0.0
        %896 = vmatprep.subr.mxu0 0.0
        %897 = vmatpush1.msra.mxu0 %v864
        %898 = vmatprep.subr.mxu0 0.0
        %899 = vmatpush1.msra.mxu0 %v863
        %900 = vmatprep.subr.mxu0 0.0
        %901 = vmatpush1.msra.mxu0 %v862
        %902 = vmatprep.subr.mxu0 0.0
        %903 = vmatpush1.msra.mxu0 %v861
        %904 = vmatprep.subr.mxu0 0.0
        %905 = vmatpush1.msra.mxu0 %v860
        %906 = vmatprep.subr.mxu0 0.0
        %907 = vmatpush1.msra.mxu0 %v859
        %908 = vmatprep.subr.mxu0 0.0
        %909 = vmatpush2.msra.mxu0 0.0
        %910 = vmatprep.subr.mxu0 0.0
        %911 = vmatpush2.msra.mxu0 0.0
        %912 = vmatprep.subr.mxu0 0.0
        %913 = vmatpush2.msra.mxu0 0.0
        %914 = vmatprep.subr.mxu0 0.0
        %915 = vmatpush2.msra.mxu0 0.0
        %916 = vmatprep.subr.mxu0 0.0
        %917 = vmatpush2.msra.mxu0 0.0
        %918 = vmatprep.subr.mxu0 0.0
        %919 = vmatpush2.msra.mxu0 0.0
        %920 = vmatprep.subr.mxu0 0.0
        %921 = vmatpush2.msra.mxu0 0.0
        %922 = vmatprep.subr.mxu0 0.0
        %923 = vmatpush2.msra.mxu0 0.0
        %924 = vmatprep.subr.mxu0 0.0
        %925 = vmatpush2.msra.mxu0 0.0
        %926 = vmatprep.subr.mxu0 0.0
        %927 = vmatpush2.msra.mxu0 0.0
        %928 = vmatprep.subr.mxu0 0.0
        %929 = vmatpush2.msra.mxu0 0.0
        %930 = vmatprep.subr.mxu0 0.0
        %931 = vmatpush2.msra.mxu0 0.0
        %932 = vmatprep.subr.mxu0 0.0
        %933 = vmatpush2.msra.mxu0 0.0
        %934 = vmatprep.subr.mxu0 0.0
        %935 = vmatpush2.msra.mxu0 0.0
        %936 = vmatprep.subr.mxu0 0.0
        %937 = vmatpush2.msra.mxu0 0.0
        %938 = vmatprep.subr.mxu0 0.0
        %939 = vmatpush2.msra.mxu0 0.0
        %940 = vmatprep.mubr.f32.mxu0 0.0
        %941 = vmatmul.mubr.f32.gmra.mxu0 %v874
        %v942 = vpop.f32.mrf.mxu0
        %v943 = vadd.f32 %v870, %v942
        %v944 = vpop.f32.mrf.mxu0
        %945 = vdwg.mxu0
        %v946 = vmul.f32 %v943, 0.01
        %v947 = vmax.f32 %v943, %v946
        %v948 = vld [vmem:[%s8] sm:$0xff]
        %v949 = vld [vmem:[%s8 + $0x8] sm:$0xff]
        %v950 = vld [vmem:[%s8 + $0x10] sm:$0xff]
        %v951 = vld [vmem:[%s8 + $0x18] sm:$0xff]
        %v952 = vld [vmem:[%s9] sm:$0x1]
        %v954 = vlaneseq
        %v955 = vshrl.u32 %v954, 7
        %v956 = vsub.s32 0, %v955
        %v957 = vrot.slane %v952, %v956
        %v960 = vsel %vm692, %v947, 0
        %962 = vmatprep.subr.mxu0 0.0
        %963 = vmatpush1.msra.mxu0 0.0
        %964 = vmatprep.subr.mxu0 0.0
        %965 = vmatpush1.msra.mxu0 0.0
        %966 = vmatprep.subr.mxu0 0.0
        %967 = vmatpush1.msra.mxu0 0.0
        %968 = vmatprep.subr.mxu0 0.0
        %969 = vmatpush1.msra.mxu0 0.0
        %970 = vmatprep.subr.mxu0 0.0
        %971 = vmatpush1.msra.mxu0 0.0
        %972 = vmatprep.subr.mxu0 0.0
        %973 = vmatpush1.msra.mxu0 0.0
        %974 = vmatprep.subr.mxu0 0.0
        %975 = vmatpush1.msra.mxu0 0.0
        %976 = vmatprep.subr.mxu0 0.0
        %977 = vmatpush1.msra.mxu0 0.0
        %978 = vmatprep.subr.mxu0 0.0
        %979 = vmatpush1.msra.mxu0 0.0
        %980 = vmatprep.subr.mxu0 0.0
        %981 = vmatpush1.msra.mxu0 0.0
        %982 = vmatprep.subr.mxu0 0.0
        %983 = vmatpush1.msra.mxu0 0.0
        %984 = vmatprep.subr.mxu0 0.0
        %985 = vmatpush1.msra.mxu0 0.0
        %986 = vmatprep.subr.mxu0 0.0
        %987 = vmatpush1.msra.mxu0 %v951
        %988 = vmatprep.subr.mxu0 0.0
        %989 = vmatpush1.msra.mxu0 %v950
        %990 = vmatprep.subr.mxu0 0.0
        %991 = vmatpush1.msra.mxu0 %v949
        %992 = vmatprep.subr.mxu0 0.0
        %993 = vmatpush1.msra.mxu0 %v948
        %994 = vmatprep.subr.mxu0 0.0
        %995 = vmatpush2.msra.mxu0 0.0
        %996 = vmatprep.subr.mxu0 0.0
        %997 = vmatpush2.msra.mxu0 0.0
        %998 = vmatprep.subr.mxu0 0.0
        %999 = vmatpush2.msra.mxu0 0.0
        %1000 = vmatprep.subr.mxu0 0.0
        %1001 = vmatpush2.msra.mxu0 0.0
        %1002 = vmatprep.subr.mxu0 0.0
        %1003 = vmatpush2.msra.mxu0 0.0
        %1004 = vmatprep.subr.mxu0 0.0
        %1005 = vmatpush2.msra.mxu0 0.0
        %1006 = vmatprep.subr.mxu0 0.0
        %1007 = vmatpush2.msra.mxu0 0.0
        %1008 = vmatprep.subr.mxu0 0.0
        %1009 = vmatpush2.msra.mxu0 0.0
        %1010 = vmatprep.subr.mxu0 0.0
        %1011 = vmatpush2.msra.mxu0 0.0
        %1012 = vmatprep.subr.mxu0 0.0
        %1013 = vmatpush2.msra.mxu0 0.0
        %1014 = vmatprep.subr.mxu0 0.0
        %1015 = vmatpush2.msra.mxu0 0.0
        %1016 = vmatprep.subr.mxu0 0.0
        %1017 = vmatpush2.msra.mxu0 0.0
        %1018 = vmatprep.subr.mxu0 0.0
        %1019 = vmatpush2.msra.mxu0 0.0
        %1020 = vmatprep.subr.mxu0 0.0
        %1021 = vmatpush2.msra.mxu0 0.0
        %1022 = vmatprep.subr.mxu0 0.0
        %1023 = vmatpush2.msra.mxu0 0.0
        %1024 = vmatprep.subr.mxu0 0.0
        %1025 = vmatpush2.msra.mxu0 0.0
        %1026 = vmatprep.mubr.f32.mxu0 0.0
        %1027 = vmatmul.mubr.f32.gmra.mxu0 %v960
        %v1028 = vpop.f32.mrf.mxu0
        %v1029 = vadd.f32 %v957, %v1028
        %v1030 = vpop.f32.mrf.mxu0
        %1031 = vdwg.mxu0
        %v1032 = vld [vmem:[%s10] sm:$0xff]
        %v1033 = vld [vmem:[%s10 + $0x8] sm:$0xff]
        %v1034 = vld [vmem:[%s10 + $0x10] sm:$0xff]
        %v1035 = vld [vmem:[%s10 + $0x18] sm:$0xff]
        %v1036 = vld [vmem:[%s11] sm:$0x1]
        %v1038 = vlaneseq
        %v1039 = vshrl.u32 %v1038, 7
        %v1040 = vsub.s32 0, %v1039
        %v1041 = vrot.slane %v1036, %v1040
        %1043 = vmatprep.subr.mxu0 0.0
        %1044 = vmatpush1.msra.mxu0 0.0
        %1045 = vmatprep.subr.mxu0 0.0
        %1046 = vmatpush1.msra.mxu0 0.0
        %1047 = vmatprep.subr.mxu0 0.0
        %1048 = vmatpush1.msra.mxu0 0.0
        %1049 = vmatprep.subr.mxu0 0.0
        %1050 = vmatpush1.msra.mxu0 0.0
        %1051 = vmatprep.subr.mxu0 0.0
        %1052 = vmatpush1.msra.mxu0 0.0
        %1053 = vmatprep.subr.mxu0 0.0
        %1054 = vmatpush1.msra.mxu0 0.0
        %1055 = vmatprep.subr.mxu0 0.0
        %1056 = vmatpush1.msra.mxu0 0.0
        %1057 = vmatprep.subr.mxu0 0.0
        %1058 = vmatpush1.msra.mxu0 0.0
        %1059 = vmatprep.subr.mxu0 0.0
        %1060 = vmatpush1.msra.mxu0 0.0
        %1061 = vmatprep.subr.mxu0 0.0
        %1062 = vmatpush1.msra.mxu0 0.0
        %1063 = vmatprep.subr.mxu0 0.0
        %1064 = vmatpush1.msra.mxu0 0.0
        %1065 = vmatprep.subr.mxu0 0.0
        %1066 = vmatpush1.msra.mxu0 0.0
        %1067 = vmatprep.subr.mxu0 0.0
        %1068 = vmatpush1.msra.mxu0 %v1035
        %1069 = vmatprep.subr.mxu0 0.0
        %1070 = vmatpush1.msra.mxu0 %v1034
        %1071 = vmatprep.subr.mxu0 0.0
        %1072 = vmatpush1.msra.mxu0 %v1033
        %1073 = vmatprep.subr.mxu0 0.0
        %1074 = vmatpush1.msra.mxu0 %v1032
        %1075 = vmatprep.subr.mxu0 0.0
        %1076 = vmatpush2.msra.mxu0 0.0
        %1077 = vmatprep.subr.mxu0 0.0
        %1078 = vmatpush2.msra.mxu0 0.0
        %1079 = vmatprep.subr.mxu0 0.0
        %1080 = vmatpush2.msra.mxu0 0.0
        %1081 = vmatprep.subr.mxu0 0.0
        %1082 = vmatpush2.msra.mxu0 0.0
        %1083 = vmatprep.subr.mxu0 0.0
        %1084 = vmatpush2.msra.mxu0 0.0
        %1085 = vmatprep.subr.mxu0 0.0
        %1086 = vmatpush2.msra.mxu0 0.0
        %1087 = vmatprep.subr.mxu0 0.0
        %1088 = vmatpush2.msra.mxu0 0.0
        %1089 = vmatprep.subr.mxu0 0.0
        %1090 = vmatpush2.msra.mxu0 0.0
        %1091 = vmatprep.subr.mxu0 0.0
        %1092 = vmatpush2.msra.mxu0 0.0
        %1093 = vmatprep.subr.mxu0 0.0
        %1094 = vmatpush2.msra.mxu0 0.0
        %1095 = vmatprep.subr.mxu0 0.0
        %1096 = vmatpush2.msra.mxu0 0.0
        %1097 = vmatprep.subr.mxu0 0.0
        %1098 = vmatpush2.msra.mxu0 0.0
        %1099 = vmatprep.subr.mxu0 0.0
        %1100 = vmatpush2.msra.mxu0 0.0
        %1101 = vmatprep.subr.mxu0 0.0
        %1102 = vmatpush2.msra.mxu0 0.0
        %1103 = vmatprep.subr.mxu0 0.0
        %1104 = vmatpush2.msra.mxu0 0.0
        %1105 = vmatprep.subr.mxu0 0.0
        %1106 = vmatpush2.msra.mxu0 0.0
        %1107 = vmatprep.mubr.f32.mxu0 0.0
        %1108 = vmatmul.mubr.f32.gmra.mxu0 %v960
        %v1109 = vpop.f32.mrf.mxu0
        %v1110 = vadd.f32 %v1041, %v1109
        %v1111 = vpop.f32.mrf.mxu0
        %1112 = vdwg.mxu0
        %v1113 = vld [vmem:[%s679] sm:$0xff]
        %v1114 = vmul.f32 %v1110, 0.5
        %v1115 = vmul.f32 %v1114, 1.442695
        %v1116 = vpow.pop %v1115
        %v1117 = vmul.f32 %v1113, %v1116
        %v1118 = vadd.f32 %v1029, %v1117
        %v1119 = vld [vmem:[%s12] sm:$0xff]
        %v1120 = vld [vmem:[%s12 + $0x8] sm:$0xff]
        %v1121 = vld [vmem:[%s13] sm:$0x1]
        %v1123 = vlaneseq
        %v1124 = vshrl.u32 %v1123, 7
        %v1125 = vsub.s32 0, %v1124
        %v1126 = vrot.slane %v1121, %v1125
        %vm1128 = vcmask 130048
        %v1130 = vsel %vm1128, %v1118, 0
        %1132 = vmatprep.subr.mxu0 0.0
        %1133 = vmatpush1.msra.mxu0 0.0
        %1134 = vmatprep.subr.mxu0 0.0
        %1135 = vmatpush1.msra.mxu0 0.0
        %1136 = vmatprep.subr.mxu0 0.0
        %1137 = vmatpush1.msra.mxu0 0.0
        %1138 = vmatprep.subr.mxu0 0.0
        %1139 = vmatpush1.msra.mxu0 0.0
        %1140 = vmatprep.subr.mxu0 0.0
        %1141 = vmatpush1.msra.mxu0 0.0
        %1142 = vmatprep.subr.mxu0 0.0
        %1143 = vmatpush1.msra.mxu0 0.0
        %1144 = vmatprep.subr.mxu0 0.0
        %1145 = vmatpush1.msra.mxu0 0.0
        %1146 = vmatprep.subr.mxu0 0.0
        %1147 = vmatpush1.msra.mxu0 0.0
        %1148 = vmatprep.subr.mxu0 0.0
        %1149 = vmatpush1.msra.mxu0 0.0
        %1150 = vmatprep.subr.mxu0 0.0
        %1151 = vmatpush1.msra.mxu0 0.0
        %1152 = vmatprep.subr.mxu0 0.0
        %1153 = vmatpush1.msra.mxu0 0.0
        %1154 = vmatprep.subr.mxu0 0.0
        %1155 = vmatpush1.msra.mxu0 0.0
        %1156 = vmatprep.subr.mxu0 0.0
        %1157 = vmatpush1.msra.mxu0 0.0
        %1158 = vmatprep.subr.mxu0 0.0
        %1159 = vmatpush1.msra.mxu0 0.0
        %1160 = vmatprep.subr.mxu0 0.0
        %1161 = vmatpush1.msra.mxu0 %v1120
        %1162 = vmatprep.subr.mxu0 0.0
        %1163 = vmatpush1.msra.mxu0 %v1119
        %1164 = vmatprep.subr.mxu0 0.0
        %1165 = vmatpush2.msra.mxu0 0.0
        %1166 = vmatprep.subr.mxu0 0.0
        %1167 = vmatpush2.msra.mxu0 0.0
        %1168 = vmatprep.subr.mxu0 0.0
        %1169 = vmatpush2.msra.mxu0 0.0
        %1170 = vmatprep.subr.mxu0 0.0
        %1171 = vmatpush2.msra.mxu0 0.0
        %1172 = vmatprep.subr.mxu0 0.0
        %1173 = vmatpush2.msra.mxu0 0.0
        %1174 = vmatprep.subr.mxu0 0.0
        %1175 = vmatpush2.msra.mxu0 0.0
        %1176 = vmatprep.subr.mxu0 0.0
        %1177 = vmatpush2.msra.mxu0 0.0
        %1178 = vmatprep.subr.mxu0 0.0
        %1179 = vmatpush2.msra.mxu0 0.0
        %1180 = vmatprep.subr.mxu0 0.0
        %1181 = vmatpush2.msra.mxu0 0.0
        %1182 = vmatprep.subr.mxu0 0.0
        %1183 = vmatpush2.msra.mxu0 0.0
        %1184 = vmatprep.subr.mxu0 0.0
        %1185 = vmatpush2.msra.mxu0 0.0
        %1186 = vmatprep.subr.mxu0 0.0
        %1187 = vmatpush2.msra.mxu0 0.0
        %1188 = vmatprep.subr.mxu0 0.0
        %1189 = vmatpush2.msra.mxu0 0.0
        %1190 = vmatprep.subr.mxu0 0.0
        %1191 = vmatpush2.msra.mxu0 0.0
        %1192 = vmatprep.subr.mxu0 0.0
        %1193 = vmatpush2.msra.mxu0 0.0
        %1194 = vmatprep.subr.mxu0 0.0
        %1195 = vmatpush2.msra.mxu0 0.0
        %1196 = vmatprep.mubr.f32.mxu0 0.0
        %1197 = vmatmul.mubr.f32.gmra.mxu0 %v1130
        %v1198 = vpop.f32.mrf.mxu0
        %v1199 = vadd.f32 %v1126, %v1198
        %v1200 = vpop.f32.mrf.mxu0
        %1201 = vdwg.mxu0
        %v1202 = vmul.f32 %v1199, 0.01
        %v1203 = vmax.f32 %v1199, %v1202
        %v1204 = vld [vmem:[%s14] sm:$0xff]
        %v1205 = vld [vmem:[%s14 + $0x8] sm:$0xff]
        %v1206 = vld [vmem:[%s14 + $0x10] sm:$0xff]
        %v1207 = vld [vmem:[%s14 + $0x18] sm:$0xff]
        %v1208 = vld [vmem:[%s15] sm:$0x1]
        %v1210 = vlaneseq
        %v1211 = vshrl.u32 %v1210, 7
        %v1212 = vsub.s32 0, %v1211
        %v1213 = vrot.slane %v1208, %v1212
        %v1216 = vsel %vm692, %v1203, 0
        %1218 = vmatprep.subr.mxu0 0.0
        %1219 = vmatpush1.msra.mxu0 0.0
        %1220 = vmatprep.subr.mxu0 0.0
        %1221 = vmatpush1.msra.mxu0 0.0
        %1222 = vmatprep.subr.mxu0 0.0
        %1223 = vmatpush1.msra.mxu0 0.0
        %1224 = vmatprep.subr.mxu0 0.0
        %1225 = vmatpush1.msra.mxu0 0.0
        %1226 = vmatprep.subr.mxu0 0.0
        %1227 = vmatpush1.msra.mxu0 0.0
        %1228 = vmatprep.subr.mxu0 0.0
        %1229 = vmatpush1.msra.mxu0 0.0
        %1230 = vmatprep.subr.mxu0 0.0
        %1231 = vmatpush1.msra.mxu0 0.0
        %1232 = vmatprep.subr.mxu0 0.0
        %1233 = vmatpush1.msra.mxu0 0.0
        %1234 = vmatprep.subr.mxu0 0.0
        %1235 = vmatpush1.msra.mxu0 0.0
        %1236 = vmatprep.subr.mxu0 0.0
        %1237 = vmatpush1.msra.mxu0 0.0
        %1238 = vmatprep.subr.mxu0 0.0
        %1239 = vmatpush1.msra.mxu0 0.0
        %1240 = vmatprep.subr.mxu0 0.0
        %1241 = vmatpush1.msra.mxu0 0.0
        %1242 = vmatprep.subr.mxu0 0.0
        %1243 = vmatpush1.msra.mxu0 %v1207
        %1244 = vmatprep.subr.mxu0 0.0
        %1245 = vmatpush1.msra.mxu0 %v1206
        %1246 = vmatprep.subr.mxu0 0.0
        %1247 = vmatpush1.msra.mxu0 %v1205
        %1248 = vmatprep.subr.mxu0 0.0
        %1249 = vmatpush1.msra.mxu0 %v1204
        %1250 = vmatprep.subr.mxu0 0.0
        %1251 = vmatpush2.msra.mxu0 0.0
        %1252 = vmatprep.subr.mxu0 0.0
        %1253 = vmatpush2.msra.mxu0 0.0
        %1254 = vmatprep.subr.mxu0 0.0
        %1255 = vmatpush2.msra.mxu0 0.0
        %1256 = vmatprep.subr.mxu0 0.0
        %1257 = vmatpush2.msra.mxu0 0.0
        %1258 = vmatprep.subr.mxu0 0.0
        %1259 = vmatpush2.msra.mxu0 0.0
        %1260 = vmatprep.subr.mxu0 0.0
        %1261 = vmatpush2.msra.mxu0 0.0
        %1262 = vmatprep.subr.mxu0 0.0
        %1263 = vmatpush2.msra.mxu0 0.0
        %1264 = vmatprep.subr.mxu0 0.0
        %1265 = vmatpush2.msra.mxu0 0.0
        %1266 = vmatprep.subr.mxu0 0.0
        %1267 = vmatpush2.msra.mxu0 0.0
        %1268 = vmatprep.subr.mxu0 0.0
        %1269 = vmatpush2.msra.mxu0 0.0
        %1270 = vmatprep.subr.mxu0 0.0
        %1271 = vmatpush2.msra.mxu0 0.0
        %1272 = vmatprep.subr.mxu0 0.0
        %1273 = vmatpush2.msra.mxu0 0.0
        %1274 = vmatprep.subr.mxu0 0.0
        %1275 = vmatpush2.msra.mxu0 0.0
        %1276 = vmatprep.subr.mxu0 0.0
        %1277 = vmatpush2.msra.mxu0 0.0
        %1278 = vmatprep.subr.mxu0 0.0
        %1279 = vmatpush2.msra.mxu0 0.0
        %1280 = vmatprep.subr.mxu0 0.0
        %1281 = vmatpush2.msra.mxu0 0.0
        %1282 = vmatprep.mubr.f32.mxu0 0.0
        %1283 = vmatmul.mubr.f32.gmra.mxu0 %v1216
        %v1284 = vpop.f32.mrf.mxu0
        %v1285 = vadd.f32 %v1213, %v1284
        %v1286 = vpop.f32.mrf.mxu0
        %1287 = vdwg.mxu0
        %v1288 = vmul.f32 %v1285, 0.01
        %v1289 = vmax.f32 %v1285, %v1288
        %v1290 = vld [vmem:[%s16] sm:$0xff]
        %v1291 = vld [vmem:[%s16 + $0x8] sm:$0xff]
        %v1292 = vld [vmem:[%s16 + $0x10] sm:$0xff]
        %v1293 = vld [vmem:[%s16 + $0x18] sm:$0xff]
        %v1294 = vld [vmem:[%s16 + $0x20] sm:$0xff]
        %v1295 = vld [vmem:[%s16 + $0x28] sm:$0xff]
        %v1296 = vld [vmem:[%s17] sm:$0x1]
        %v1298 = vlaneseq
        %v1299 = vshrl.u32 %v1298, 7
        %v1300 = vsub.s32 0, %v1299
        %v1301 = vrot.slane %v1296, %v1300
        %v1304 = vsel %vm872, %v1289, 0
        %1306 = vmatprep.subr.mxu0 0.0
        %1307 = vmatpush1.msra.mxu0 0.0
        %1308 = vmatprep.subr.mxu0 0.0
        %1309 = vmatpush1.msra.mxu0 0.0
        %1310 = vmatprep.subr.mxu0 0.0
        %1311 = vmatpush1.msra.mxu0 0.0
        %1312 = vmatprep.subr.mxu0 0.0
        %1313 = vmatpush1.msra.mxu0 0.0
        %1314 = vmatprep.subr.mxu0 0.0
        %1315 = vmatpush1.msra.mxu0 0.0
        %1316 = vmatprep.subr.mxu0 0.0
        %1317 = vmatpush1.msra.mxu0 0.0
        %1318 = vmatprep.subr.mxu0 0.0
        %1319 = vmatpush1.msra.mxu0 0.0
        %1320 = vmatprep.subr.mxu0 0.0
        %1321 = vmatpush1.msra.mxu0 0.0
        %1322 = vmatprep.subr.mxu0 0.0
        %1323 = vmatpush1.msra.mxu0 0.0
        %1324 = vmatprep.subr.mxu0 0.0
        %1325 = vmatpush1.msra.mxu0 0.0
        %1326 = vmatprep.subr.mxu0 0.0
        %1327 = vmatpush1.msra.mxu0 %v1295
        %1328 = vmatprep.subr.mxu0 0.0
        %1329 = vmatpush1.msra.mxu0 %v1294
        %1330 = vmatprep.subr.mxu0 0.0
        %1331 = vmatpush1.msra.mxu0 %v1293
        %1332 = vmatprep.subr.mxu0 0.0
        %1333 = vmatpush1.msra.mxu0 %v1292
        %1334 = vmatprep.subr.mxu0 0.0
        %1335 = vmatpush1.msra.mxu0 %v1291
        %1336 = vmatprep.subr.mxu0 0.0
        %1337 = vmatpush1.msra.mxu0 %v1290
        %1338 = vmatprep.subr.mxu0 0.0
        %1339 = vmatpush2.msra.mxu0 0.0
        %1340 = vmatprep.subr.mxu0 0.0
        %1341 = vmatpush2.msra.mxu0 0.0
        %1342 = vmatprep.subr.mxu0 0.0
        %1343 = vmatpush2.msra.mxu0 0.0
        %1344 = vmatprep.subr.mxu0 0.0
        %1345 = vmatpush2.msra.mxu0 0.0
        %1346 = vmatprep.subr.mxu0 0.0
        %1347 = vmatpush2.msra.mxu0 0.0
        %1348 = vmatprep.subr.mxu0 0.0
        %1349 = vmatpush2.msra.mxu0 0.0
        %1350 = vmatprep.subr.mxu0 0.0
        %1351 = vmatpush2.msra.mxu0 0.0
        %1352 = vmatprep.subr.mxu0 0.0
        %1353 = vmatpush2.msra.mxu0 0.0
        %1354 = vmatprep.subr.mxu0 0.0
        %1355 = vmatpush2.msra.mxu0 0.0
        %1356 = vmatprep.subr.mxu0 0.0
        %1357 = vmatpush2.msra.mxu0 0.0
        %1358 = vmatprep.subr.mxu0 0.0
        %1359 = vmatpush2.msra.mxu0 0.0
        %1360 = vmatprep.subr.mxu0 0.0
        %1361 = vmatpush2.msra.mxu0 0.0
        %1362 = vmatprep.subr.mxu0 0.0
        %1363 = vmatpush2.msra.mxu0 0.0
        %1364 = vmatprep.subr.mxu0 0.0
        %1365 = vmatpush2.msra.mxu0 0.0
        %1366 = vmatprep.subr.mxu0 0.0
        %1367 = vmatpush2.msra.mxu0 0.0
        %1368 = vmatprep.subr.mxu0 0.0
        %1369 = vmatpush2.msra.mxu0 0.0
        %1370 = vmatprep.mubr.f32.mxu0 0.0
        %1371 = vmatmul.mubr.f32.gmra.mxu0 %v1304
        %v1372 = vpop.f32.mrf.mxu0
        %v1373 = vadd.f32 %v1301, %v1372
        %v1374 = vpop.f32.mrf.mxu0
        %1375 = vdwg.mxu0
        %v1376 = vmul.f32 %v1373, 0.01
        %v1377 = vmax.f32 %v1373, %v1376
        %v1378 = vld [vmem:[%s18] sm:$0xff]
        %v1379 = vld [vmem:[%s18 + $0x8] sm:$0xff]
        %v1380 = vld [vmem:[%s18 + $0x10] sm:$0xff]
        %v1381 = vld [vmem:[%s18 + $0x18] sm:$0xff]
        %v1382 = vld [vmem:[%s18 + $0x20] sm:$0xff]
        %v1383 = vld [vmem:[%s18 + $0x28] sm:$0xff]
        %v1384 = vld [vmem:[%s18 + $0x30] sm:$0xff]
        %v1385 = vld [vmem:[%s18 + $0x38] sm:$0xff]
        %v1386 = vld [vmem:[%s19] sm:$0x1]
        %v1388 = vlaneseq
        %v1389 = vshrl.u32 %v1388, 7
        %v1390 = vsub.s32 0, %v1389
        %v1391 = vrot.slane %v1386, %v1390
        %v1394 = vsel %vm783, %v1377, 0
        %1396 = vmatprep.subr.mxu0 0.0
        %1397 = vmatpush1.msra.mxu0 0.0
        %1398 = vmatprep.subr.mxu0 0.0
        %1399 = vmatpush1.msra.mxu0 0.0
        %1400 = vmatprep.subr.mxu0 0.0
        %1401 = vmatpush1.msra.mxu0 0.0
        %1402 = vmatprep.subr.mxu0 0.0
        %1403 = vmatpush1.msra.mxu0 0.0
        %1404 = vmatprep.subr.mxu0 0.0
        %1405 = vmatpush1.msra.mxu0 0.0
        %1406 = vmatprep.subr.mxu0 0.0
        %1407 = vmatpush1.msra.mxu0 0.0
        %1408 = vmatprep.subr.mxu0 0.0
        %1409 = vmatpush1.msra.mxu0 0.0
        %1410 = vmatprep.subr.mxu0 0.0
        %1411 = vmatpush1.msra.mxu0 0.0
        %1412 = vmatprep.subr.mxu0 0.0
        %1413 = vmatpush1.msra.mxu0 %v1385
        %1414 = vmatprep.subr.mxu0 0.0
        %1415 = vmatpush1.msra.mxu0 %v1384
        %1416 = vmatprep.subr.mxu0 0.0
        %1417 = vmatpush1.msra.mxu0 %v1383
        %1418 = vmatprep.subr.mxu0 0.0
        %1419 = vmatpush1.msra.mxu0 %v1382
        %1420 = vmatprep.subr.mxu0 0.0
        %1421 = vmatpush1.msra.mxu0 %v1381
        %1422 = vmatprep.subr.mxu0 0.0
        %1423 = vmatpush1.msra.mxu0 %v1380
        %1424 = vmatprep.subr.mxu0 0.0
        %1425 = vmatpush1.msra.mxu0 %v1379
        %1426 = vmatprep.subr.mxu0 0.0
        %1427 = vmatpush1.msra.mxu0 %v1378
        %1428 = vmatprep.subr.mxu0 0.0
        %1429 = vmatpush2.msra.mxu0 0.0
        %1430 = vmatprep.subr.mxu0 0.0
        %1431 = vmatpush2.msra.mxu0 0.0
        %1432 = vmatprep.subr.mxu0 0.0
        %1433 = vmatpush2.msra.mxu0 0.0
        %1434 = vmatprep.subr.mxu0 0.0
        %1435 = vmatpush2.msra.mxu0 0.0
        %1436 = vmatprep.subr.mxu0 0.0
        %1437 = vmatpush2.msra.mxu0 0.0
        %1438 = vmatprep.subr.mxu0 0.0
        %1439 = vmatpush2.msra.mxu0 0.0
        %1440 = vmatprep.subr.mxu0 0.0
        %1441 = vmatpush2.msra.mxu0 0.0
        %1442 = vmatprep.subr.mxu0 0.0
        %1443 = vmatpush2.msra.mxu0 0.0
        %1444 = vmatprep.subr.mxu0 0.0
        %1445 = vmatpush2.msra.mxu0 0.0
        %1446 = vmatprep.subr.mxu0 0.0
        %1447 = vmatpush2.msra.mxu0 0.0
        %1448 = vmatprep.subr.mxu0 0.0
        %1449 = vmatpush2.msra.mxu0 0.0
        %1450 = vmatprep.subr.mxu0 0.0
        %1451 = vmatpush2.msra.mxu0 0.0
        %1452 = vmatprep.subr.mxu0 0.0
        %1453 = vmatpush2.msra.mxu0 0.0
        %1454 = vmatprep.subr.mxu0 0.0
        %1455 = vmatpush2.msra.mxu0 0.0
        %1456 = vmatprep.subr.mxu0 0.0
        %1457 = vmatpush2.msra.mxu0 0.0
        %1458 = vmatprep.subr.mxu0 0.0
        %1459 = vmatpush2.msra.mxu0 0.0
        %1460 = vmatprep.mubr.f32.mxu0 0.0
        %1461 = vmatmul.mubr.f32.gmra.mxu0 %v1394
        %v1462 = vpop.f32.mrf.mxu0
        %v1463 = vadd.f32 %v1391, %v1462
        %v1464 = vpop.f32.mrf.mxu0
        %1465 = vdwg.mxu0
        %v1466 = vmul.f32 %v1463, 0.5
        %v1467 = vtanh.pop %v1466
        %v1468 = vmul.f32 %v1467, 0.5
        %v1469 = vadd.f32 %v1468, 0.5
        %1470 = vst.msk [vmem:[%s664] sm:$0xff] %vm692, %v1469
        %1472 = vrot.lane.b32.xlu0 %v1110, 16
        %v1473 = vpop.permute.xlu0 %1472
        %1475 = vrot.lane.b32.xlu0 %v1118, 32
        %v1476 = vpop.permute.xlu0 %1475
        %v1478 = vsel %vm1128, %v1029, %v1473
        %v1479 = vsel %vm692, %v1478, %v1476
        %1480 = vst.msk [vmem:[%s671] sm:$0xff] %vm872, %v1479
        %s1481 = sand.u32 %s477, 1
        %s1482 = scalar_lea.sflag [#allocation3], %s1481
        %s1483 = sand.u32 %s477, 1
        %s1484 = smul.addr %s1483, 8
        %s1485 = scalar_lea.vmem [#allocation2], %s1484
        %s1486 = sand.u32 %s503, 1
        %s1487 = scalar_lea.sflag [#allocation5], %s1486
        %s1488 = sand.u32 %s503, 1
        %s1489 = smul.addr %s1488, 8
        %s1490 = scalar_lea.vmem [#allocation4], %s1489
        // Predicated region
        $region101: #{tpu_custom_call.1} parent=99 // pred_check
          %p1491 = pneg %p487
        $region102: #{tpu_custom_call.1} parent=99 // pred_check_branch
          %1493 = sbr.rel (%p1491) target = $region104
        $region103: #{tpu_custom_call.1} parent=99 // pred_region
          %s1495 = ssub.s32 128, 128
          %1496 = vsyncadd %s1482, %s1495
          %s1497 = smul.addr %s39, 128
          %s1498 = scalar_lea.hbm %s20, %s1497
          %s1500 = sshll.u32 %s1485, 4
          %s1501 = int_to_ptr.vmem [resolvable:$true] %s1500
          %1503 = dma.vmem_to_hbm [thread:$0]  %s1501, 128, %s1498, %s1482
        $region104: #{tpu_custom_call.1} parent=99 // pred_fallthru
          _
        // Predicated region
        $region105: #{tpu_custom_call.1} parent=99 // pred_check
          %p1504 = pneg %p513
        $region106: #{tpu_custom_call.1} parent=99 // pred_check_branch
          %1506 = sbr.rel (%p1504) target = $region108
        $region107: #{tpu_custom_call.1} parent=99 // pred_region
          %s1508 = ssub.s32 128, 128
          %1509 = vsyncadd %s1487, %s1508
          %s1510 = smul.addr %s39, 128
          %s1511 = scalar_lea.hbm %s21, %s1510
          %s1513 = sshll.u32 %s1490, 4
          %s1514 = int_to_ptr.vmem [resolvable:$true] %s1513
          %1516 = dma.vmem_to_hbm [thread:$0]  %s1514, 128, %s1511, %s1487
        $region108: #{tpu_custom_call.1} parent=99 // pred_fallthru
          _
      $region100: #{tpu_custom_call.1} parent=5 // pred_fallthru
        _
      %p1517 = scmp.le.s32.totalorder 2, %s34
      // Predicated region
      $region109: #{tpu_custom_call.1} parent=5 // pred_check
        %p1518 = pneg %p1517
      $region110: #{tpu_custom_call.1} parent=5 // pred_check_branch
        %1520 = sbr.rel (%p1518) target = $region112
      $region111: #{tpu_custom_call.1} parent=5 // pred_region
        %s1521 = ssub.s32 %s34, 2
        // Predicated region
        $region113: #{tpu_custom_call.1} parent=111 // pred_check
          %p1522 = pneg %p493
        $region114: #{tpu_custom_call.1} parent=111 // pred_check_branch
          %1524 = sbr.rel (%p1522) target = $region116
        $region115: #{tpu_custom_call.1} parent=111 // pred_region
          %s1525 = sand.u32 %s478, 1
          %s1526 = scalar_lea.sflag [#allocation3], %s1525
          %s1527 = sand.u32 %s478, 1
          %s1528 = smul.addr %s1527, 8
          %s1529 = scalar_lea.vmem [#allocation2], %s1528
          %1530 = dma.done %s1526, 128
        $region116: #{tpu_custom_call.1} parent=111 // pred_fallthru
          _
        // Predicated region
        $region117: #{tpu_custom_call.1} parent=111 // pred_check
          %p1531 = pneg %p519
        $region118: #{tpu_custom_call.1} parent=111 // pred_check_branch
          %1533 = sbr.rel (%p1531) target = $region120
        $region119: #{tpu_custom_call.1} parent=111 // pred_region
          %s1534 = sand.u32 %s504, 1
          %s1535 = scalar_lea.sflag [#allocation5], %s1534
          %s1536 = sand.u32 %s504, 1
          %s1537 = smul.addr %s1536, 8
          %s1538 = scalar_lea.vmem [#allocation4], %s1537
          %1539 = dma.done %s1535, 128
        $region120: #{tpu_custom_call.1} parent=111 // pred_fallthru
          _
      $region112: #{tpu_custom_call.1} parent=5 // pred_fallthru
        _
    $region6: #{tpu_custom_call.1} parent=1 // loop_footer
      %s38 = sadd.s32 1, %s34
    $region7: #{tpu_custom_call.1} parent=1 // loop_footer_branch
      %33 = sbr.rel target = $region3
    $region8: #{tpu_custom_call.1} parent=1 // loop_exit
      _
    %1540 = vsyncpa [#allocation3], 1
    %s1541 = scalar_lea.sflag [#allocation3], 1
    %1542 = vsyncpa %s1541, 1
    %1543 = vsyncpa [#allocation5], 1
    %s1544 = scalar_lea.sflag [#allocation5], 1
    %1545 = vsyncpa %s1544, 1

</llo_original>
